<compile_context>
chip_gen: v7x
topology: tpu7x:2x2x1
jax: 0.10.0
libtpu: 0.0.40
codegen_flags: <defaults>
</compile_context>

<pallas_src>
import jax
import jax.numpy as jnp
from jax.experimental import pallas as pl
from jax.experimental.pallas import tpu as pltpu


def _round_up(x, m):
    return ((x + m - 1) // m) * m


def _critic_kernel(x_ref, w1_ref, b1_ref, w2_ref, b2_ref, w3_ref, b3_ref, o_ref):
    # x_ref: (D, TB) bf16 state tile, batch on the lane axis.
    x = x_ref[...]

    # fcs1 -> (dropout = identity in eval) -> relu; f32 accumulation on the MXU.
    h1 = jnp.dot(w1_ref[...], x, preferred_element_type=jnp.float32)
    h1 = jnp.maximum(h1 + b1_ref[...], 0.0)                       # (H1, TB) f32

    # fc2 -> relu (bf16 inputs, f32 accumulation).
    h2 = jnp.dot(w2_ref[...], h1.astype(jnp.bfloat16),
                 preferred_element_type=jnp.float32)
    h2 = jnp.maximum(h2 + b2_ref[...], 0.0)                       # (H2, TB) f32

    # fc3 as a VPU multiply + cross-sublane reduction (avoids an N=1 MXU
    # matmul); result is a lane-dense (1, TB) row.
    q = jnp.sum(h2 * w3_ref[...], axis=0, keepdims=True)
    o_ref[...] = q + b3_ref[0]


def critic_forward(state, params, tb=1024):
    """state: (B, (state_size + action_size) * num_agents) f32 -> (B, 1) f32."""
    w1, b1, w2, b2, w3, b3 = params
    B, D = state.shape
    H1 = w1.shape[1]
    H2 = w2.shape[1]

    # Batch tile: large to amortize the ~0.35us per-grid-step cost, but never
    # larger than the (128-aligned) batch itself.
    tb = _round_up(min(tb, _round_up(B, 128)), 128)
    Bp = _round_up(B, tb)

    # Lane-major (feature, batch) layout; bf16 halves HBM traffic for the only
    # operand that scales with B and hits the native bf16 MXU path.
    x = state.astype(jnp.bfloat16)
    if Bp != B:
        x = jnp.pad(x, ((0, Bp - B), (0, 0)))
    xt = x.T                                          # (D, Bp) bf16

    w1t = w1.T.astype(jnp.bfloat16)                   # (H1, D)  resident
    w2t = w2.T.astype(jnp.bfloat16)                   # (H2, H1) resident
    b1c = b1.reshape(H1, 1).astype(jnp.float32)
    b2c = b2.reshape(H2, 1).astype(jnp.float32)
    w3c = w3.reshape(H2, 1).astype(jnp.float32)
    b3s = b3.reshape(1).astype(jnp.float32)           # scalar -> SMEM

    grid = (Bp // tb,)

    flops = 2 * Bp * (D * H1 + H1 * H2 + H2)
    bytes_accessed = (Bp * D * 2 + Bp * 4                 # streamed state in, q out
                      + H1 * D * 2 + H2 * H1 * 2          # bf16 weights (one-time)
                      + (H1 + H2 + H2 + 1) * 4)           # f32 biases + w3

    out = pl.pallas_call(
        _critic_kernel,
        out_shape=jax.ShapeDtypeStruct((1, Bp), jnp.float32),
        grid_spec=pltpu.PrefetchScalarGridSpec(
            num_scalar_prefetch=0,
            grid=grid,
            in_specs=[
                pl.BlockSpec((D, tb), lambda i: (0, i)),            # state tile (streamed)
                pl.BlockSpec((H1, D), lambda i: (0, 0)),            # w1^T (resident)
                pl.BlockSpec((H1, 1), lambda i: (0, 0)),            # b1
                pl.BlockSpec((H2, H1), lambda i: (0, 0)),           # w2^T (resident)
                pl.BlockSpec((H2, 1), lambda i: (0, 0)),            # b2
                pl.BlockSpec((H2, 1), lambda i: (0, 0)),            # w3 column
                pl.BlockSpec(memory_space=pltpu.MemorySpace.SMEM),  # b3 scalar
            ],
            out_specs=pl.BlockSpec((1, tb), lambda i: (0, i)),      # lane-dense Q row
        ),
        compiler_params=pltpu.CompilerParams(
            # Batch tiles are independent -> shard grid steps across both
            # TensorCores on v7x; VMEM per step stays well under the default
            # scoped limit at tb<=4096, so vmem_limit_bytes is left alone.
            dimension_semantics=("parallel",),
        ),
        cost_estimate=pl.CostEstimate(
            flops=flops, transcendentals=0, bytes_accessed=bytes_accessed),
    )(xt, w1t, b1c, w2t, b2c, w3c, b3s)

    return out[0, :B].reshape(B, 1)


def init_params(key, in_dim, fcs1_units, fc2_units):
    """Deterministic init mirroring the module's reset_parameters().

    Weights stored as (in, out).  hidden_init uses weight.size(0) == out_features
    (exactly as the PyTorch code does); fc3 uses +/-3e-3.  Biases keep PyTorch
    Linear's default uniform(-1/sqrt(fan_in), 1/sqrt(fan_in)).
    """
    ks = jax.random.split(key, 6)
    lim1 = 1.0 / jnp.sqrt(jnp.float32(fcs1_units))   # hidden_init(fcs1)
    lim2 = 1.0 / jnp.sqrt(jnp.float32(fc2_units))    # hidden_init(fc2)
    w1 = jax.random.uniform(ks[0], (in_dim, fcs1_units), jnp.float32, -lim1, lim1)
    w2 = jax.random.uniform(ks[1], (fcs1_units, fc2_units), jnp.float32, -lim2, lim2)
    w3 = jax.random.uniform(ks[2], (fc2_units, 1), jnp.float32, -3e-3, 3e-3)
    blim1 = 1.0 / jnp.sqrt(jnp.float32(in_dim))
    blim2 = 1.0 / jnp.sqrt(jnp.float32(fcs1_units))
    blim3 = 1.0 / jnp.sqrt(jnp.float32(fc2_units))
    b1 = jax.random.uniform(ks[3], (fcs1_units,), jnp.float32, -blim1, blim1)
    b2 = jax.random.uniform(ks[4], (fc2_units,), jnp.float32, -blim2, blim2)
    b3 = jax.random.uniform(ks[5], (1,), jnp.float32, -blim3, blim3)
    return (w1, b1, w2, b2, w3, b3)


def critic_reference(state, params):
    """Pure f32 reference of the module's eval-mode forward."""
    w1, b1, w2, b2, w3, b3 = params
    h1 = jnp.maximum(state @ w1 + b1, 0.0)
    h2 = jnp.maximum(h1 @ w2 + b2, 0.0)
    return h2 @ w3 + b3


def critic_reference_bf16(state, params):
    """Reference matching the kernel's bf16-input / f32-accumulate arithmetic."""
    w1, b1, w2, b2, w3, b3 = params
    xb = state.astype(jnp.bfloat16)
    h1 = jnp.dot(xb, w1.astype(jnp.bfloat16),
                 preferred_element_type=jnp.float32) + b1
    h1 = jnp.maximum(h1, 0.0).astype(jnp.bfloat16)
    h2 = jnp.dot(h1, w2.astype(jnp.bfloat16),
                 preferred_element_type=jnp.float32) + b2
    h2 = jnp.maximum(h2, 0.0)
    q = jnp.sum(h2 * w3.reshape(1, -1), axis=-1, keepdims=True)
    return q + b3


if __name__ == "__main__":
    # Shapes implied by the module: in_dim = (state_size + action_size) * num_agents,
    # default hidden sizes fcs1_units=512, fc2_units=256.
    state_size, action_size, num_agents = 24, 2, 2
    in_dim = (state_size + action_size) * num_agents      # 52
    fcs1_units, fc2_units = 512, 256
    batch = 8                                             # padded to one 128-row tile

    key = jax.random.PRNGKey(0)
    k_params, k_state = jax.random.split(key)
    params = init_params(k_params, in_dim, fcs1_units, fc2_units)
    state = jax.random.normal(k_state, (batch, in_dim), jnp.float32)

    out = jax.block_until_ready(critic_forward(state, params))
    assert out.shape == (batch, 1)

    ref_matched = critic_reference_bf16(state, params)   # same bf16/f32 arithmetic
    ref_f32 = critic_reference(state, params)            # full-f32 semantic check
    assert jnp.allclose(out, ref_matched, atol=5e-4, rtol=1e-3), (
        float(jnp.max(jnp.abs(out - ref_matched))))
    assert jnp.allclose(out, ref_f32, atol=2e-2, rtol=2e-2), (
        float(jnp.max(jnp.abs(out - ref_f32))))

    print("KERNEL_OK")
</pallas_src>

<mosaic_0001>
module attributes {stable_mosaic.version = 11 : i64} {
  func.func @_critic_kernel(%arg0: i32, %arg1: memref<52x128xbf16, #tpu.memory_space<vmem>>, %arg2: memref<512x52xbf16, #tpu.memory_space<vmem>>, %arg3: memref<512x1xf32, #tpu.memory_space<vmem>>, %arg4: memref<256x512xbf16, #tpu.memory_space<vmem>>, %arg5: memref<256x1xf32, #tpu.memory_space<vmem>>, %arg6: memref<256x1xf32, #tpu.memory_space<vmem>>, %arg7: memref<1xf32, #tpu.memory_space<smem>>, %arg8: memref<1x128xf32, #tpu.memory_space<vmem>>) attributes {dimension_semantics = [#tpu.dimension_semantics<parallel>], iteration_bounds = array<i64: 1>, scalar_prefetch = 0 : i64, scratch_operands = 0 : i64, tpu.core_type = #tpu.core_type<tc>, window_params = [{transform_indices = @transform_0, window_bounds = array<i64: 52, 128>}, {pipeline_mode = #tpu.pipeline_mode<synchronous>, transform_indices = @transform_1, window_bounds = array<i64: 512, 52>}, {pipeline_mode = #tpu.pipeline_mode<synchronous>, transform_indices = @transform_2, window_bounds = array<i64: 512, 1>}, {pipeline_mode = #tpu.pipeline_mode<synchronous>, transform_indices = @transform_3, window_bounds = array<i64: 256, 512>}, {pipeline_mode = #tpu.pipeline_mode<synchronous>, transform_indices = @transform_4, window_bounds = array<i64: 256, 1>}, {pipeline_mode = #tpu.pipeline_mode<synchronous>, transform_indices = @transform_5, window_bounds = array<i64: 256, 1>}, {transform_indices = @transform_6, window_bounds = array<i64: 1>}, {transform_indices = @transform_7, window_bounds = array<i64: 1, 128>}]} {
    %c0 = arith.constant 0 : index
    %c0_0 = arith.constant 0 : index
    %0 = vector.load %arg1[%c0, %c0_0] : memref<52x128xbf16, #tpu.memory_space<vmem>>, vector<52x128xbf16>
    %c0_1 = arith.constant 0 : index
    %c0_2 = arith.constant 0 : index
    %1 = vector.load %arg2[%c0_1, %c0_2] : memref<512x52xbf16, #tpu.memory_space<vmem>>, vector<512x52xbf16>
    %cst = arith.constant dense<0.000000e+00> : vector<512x128xf32>
    %2 = tpu.matmul %1, %0, %cst {dimension_numbers = #tpu.dot_dimension_numbers<[1], [0], [0], [1], [0, 0, 1, 1], [], []>} : vector<512x52xbf16>, vector<52x128xbf16>, vector<512x128xf32> -> vector<512x128xf32>
    %c0_3 = arith.constant 0 : index
    %c0_4 = arith.constant 0 : index
    %3 = vector.load %arg3[%c0_3, %c0_4] : memref<512x1xf32, #tpu.memory_space<vmem>>, vector<512x1xf32>
    %4 = vector.broadcast %3 : vector<512x1xf32> to vector<512x128xf32>
    %5 = arith.addf %2, %4 : vector<512x128xf32>
    %cst_5 = arith.constant 0.000000e+00 : f32
    %6 = vector.broadcast %cst_5 : f32 to vector<512x128xf32>
    %7 = arith.maximumf %5, %6 : vector<512x128xf32>
    %c0_6 = arith.constant 0 : index
    %c0_7 = arith.constant 0 : index
    %8 = vector.load %arg4[%c0_6, %c0_7] : memref<256x512xbf16, #tpu.memory_space<vmem>>, vector<256x512xbf16>
    %9 = arith.truncf %7 : vector<512x128xf32> to vector<512x128xbf16>
    %cst_8 = arith.constant dense<0.000000e+00> : vector<256x128xf32>
    %10 = tpu.matmul %8, %9, %cst_8 {dimension_numbers = #tpu.dot_dimension_numbers<[1], [0], [0], [1], [0, 0, 1, 1], [], []>} : vector<256x512xbf16>, vector<512x128xbf16>, vector<256x128xf32> -> vector<256x128xf32>
    %c0_9 = arith.constant 0 : index
    %c0_10 = arith.constant 0 : index
    %11 = vector.load %arg5[%c0_9, %c0_10] : memref<256x1xf32, #tpu.memory_space<vmem>>, vector<256x1xf32>
    %12 = vector.broadcast %11 : vector<256x1xf32> to vector<256x128xf32>
    %13 = arith.addf %10, %12 : vector<256x128xf32>
    %cst_11 = arith.constant 0.000000e+00 : f32
    %14 = vector.broadcast %cst_11 : f32 to vector<256x128xf32>
    %15 = arith.maximumf %13, %14 : vector<256x128xf32>
    %c0_12 = arith.constant 0 : index
    %c0_13 = arith.constant 0 : index
    %16 = vector.load %arg6[%c0_12, %c0_13] : memref<256x1xf32, #tpu.memory_space<vmem>>, vector<256x1xf32>
    %17 = vector.broadcast %16 : vector<256x1xf32> to vector<256x128xf32>
    %18 = arith.mulf %15, %17 : vector<256x128xf32>
    %cst_14 = arith.constant dense<0.000000e+00> : vector<128xf32>
    %19 = vector.multi_reduction <add>, %18, %cst_14 [0] : vector<256x128xf32> to vector<128xf32>
    %20 = vector.shape_cast %19 : vector<128xf32> to vector<1x128xf32>
    %c0_15 = arith.constant 0 : index
    %21 = memref.load %arg7[%c0_15] : memref<1xf32, #tpu.memory_space<smem>>
    %22 = vector.broadcast %21 : f32 to vector<1x128xf32>
    %23 = arith.addf %20, %22 : vector<1x128xf32>
    %c0_16 = arith.constant 0 : index
    %c0_17 = arith.constant 0 : index
    %24 = vector.load %arg8[%c0_16, %c0_17] : memref<1x128xf32, #tpu.memory_space<vmem>>, vector<1x128xf32>
    tpu.vector_store %arg8[%c0_16, %c0_17], %23 {strides = array<i32>} : memref<1x128xf32, #tpu.memory_space<vmem>>, vector<1x128xf32>,
    return
  }
  func.func @transform_0(%arg0: i32) -> (i32, i32) {
    %c0_i32 = arith.constant 0 : i32
    %c0_i32_0 = arith.constant 0 : i32
    return %c0_i32, %arg0 : i32, i32
  }
  func.func @transform_1(%arg0: i32) -> (i32, i32) {
    %c0_i32 = arith.constant 0 : i32
    %c0_i32_0 = arith.constant 0 : i32
    %c0_i32_1 = arith.constant 0 : i32
    return %c0_i32, %c0_i32_0 : i32, i32
  }
  func.func @transform_2(%arg0: i32) -> (i32, i32) {
    %c0_i32 = arith.constant 0 : i32
    %c0_i32_0 = arith.constant 0 : i32
    %c0_i32_1 = arith.constant 0 : i32
    return %c0_i32, %c0_i32_0 : i32, i32
  }
  func.func @transform_3(%arg0: i32) -> (i32, i32) {
    %c0_i32 = arith.constant 0 : i32
    %c0_i32_0 = arith.constant 0 : i32
    %c0_i32_1 = arith.constant 0 : i32
    return %c0_i32, %c0_i32_0 : i32, i32
  }
  func.func @transform_4(%arg0: i32) -> (i32, i32) {
    %c0_i32 = arith.constant 0 : i32
    %c0_i32_0 = arith.constant 0 : i32
    %c0_i32_1 = arith.constant 0 : i32
    return %c0_i32, %c0_i32_0 : i32, i32
  }
  func.func @transform_5(%arg0: i32) -> (i32, i32) {
    %c0_i32 = arith.constant 0 : i32
    %c0_i32_0 = arith.constant 0 : i32
    %c0_i32_1 = arith.constant 0 : i32
    return %c0_i32, %c0_i32_0 : i32, i32
  }
  func.func @transform_6(%arg0: i32) -> i32 {
    %c0_i32 = arith.constant 0 : i32
    %c0_i32_0 = arith.constant 0 : i32
    return %c0_i32 : i32
  }
  func.func @transform_7(%arg0: i32) -> (i32, i32) {
    %c0_i32 = arith.constant 0 : i32
    %c0_i32_0 = arith.constant 0 : i32
    return %c0_i32, %arg0 : i32, i32
  }
}

</mosaic_0001>

<llo_original>
// kernel: tpu_custom_call.1
$region0: #{tpu_custom_call.1}
  #allocation0 [shape = 'u32[]', space=smem, size = 0x4, offset = 0x4, fixed_abs, tag = 'smem constant byte address 0x4 - core index']
  #allocation1 [shape = 'u32[144,128]{1,0:T(1,128)}', space=vmem, size = 0x12000, scoped, tag = 'internal scratch']
  #allocation2 [shape = 'f32[1]{0:T(128)S(6)}', space=smem, size = 0x200, scoped, tag = 'scoped memory for tpu_custom_call.1']
  %s0 = inlined_call_operand.vmem [shape: bf16[52,128], index: 0, kind: input, shape index: {}]
  %s1 = inlined_call_operand.vmem [shape: bf16[512,52], index: 1, kind: input, shape index: {}]
  %s2 = inlined_call_operand.vmem [shape: f32[512,1], index: 2, kind: input, shape index: {}]
  %s3 = inlined_call_operand.vmem [shape: bf16[256,512], index: 3, kind: input, shape index: {}]
  %s4 = inlined_call_operand.vmem [shape: f32[256,1], index: 4, kind: input, shape index: {}]
  %s5 = inlined_call_operand.vmem [shape: f32[256,1], index: 5, kind: input, shape index: {}]
  %s6 = inlined_call_operand.<no memory space> [shape: f32[1], index: 6, kind: input, shape index: {}]
  %s7 = inlined_call_operand.hbm [shape: f32[1,128], index: 7, kind: output, shape index: {}]
  %s8 = sld [smem:[#allocation0]]
  $region38: #{tpu_custom_call.1} parent=0
    _
  %s10 = ssub.s32 1, %s8
  %s11 = scalar_select 0, %s10, %s8
  %12 = sst [smem:[#allocation2]] %s6
  $region1: #{tpu_custom_call.1} parent=0
    #allocation3 [shape = 'u8[512]{0}', space=vmem, size = 0x400, scoped, tag = 'output window, operand 0, single buffered']
    #allocation4 [shape = 's32[1]{0}', space=sflag, size = 0x4, scoped, tag = 'scoped memory for tpu_custom_call.1']
    %13 = vsyncpa [#allocation4], 0
    // Predicated region
    $region2: #{tpu_custom_call.1} parent=1 // pred_check
      _
    $region3: #{tpu_custom_call.1} parent=1 // pred_check_branch
      %15 = sbr.rel (0) target = $region5
    $region4: #{tpu_custom_call.1} parent=1 // pred_region
      _
    $region5: #{tpu_custom_call.1} parent=1 // pred_fallthru
      _
    // Predicated region
    $region6: #{tpu_custom_call.1} parent=1 // pred_check
      _
    $region7: #{tpu_custom_call.1} parent=1 // pred_check_branch
      %17 = sbr.rel (0) target = $region9
    $region8: #{tpu_custom_call.1} parent=1 // pred_region
      _
    $region9: #{tpu_custom_call.1} parent=1 // pred_fallthru
      _
    // Predicated region
    $region10: #{tpu_custom_call.1} parent=1 // pred_check
      _
    $region11: #{tpu_custom_call.1} parent=1 // pred_check_branch
      %19 = sbr.rel (0) target = $region13
    $region12: #{tpu_custom_call.1} parent=1 // pred_region
      _
    $region13: #{tpu_custom_call.1} parent=1 // pred_fallthru
      _
    // Predicated region
    $region14: #{tpu_custom_call.1} parent=1 // pred_check
      _
    $region15: #{tpu_custom_call.1} parent=1 // pred_check_branch
      %21 = sbr.rel (0) target = $region17
    $region16: #{tpu_custom_call.1} parent=1 // pred_region
      _
    $region17: #{tpu_custom_call.1} parent=1 // pred_fallthru
      _
    // Predicated region
    $region18: #{tpu_custom_call.1} parent=1 // pred_check
      _
    $region19: #{tpu_custom_call.1} parent=1 // pred_check_branch
      %23 = sbr.rel (0) target = $region21
    $region20: #{tpu_custom_call.1} parent=1 // pred_region
      _
    $region21: #{tpu_custom_call.1} parent=1 // pred_fallthru
      _
    // Predicated region
    $region22: #{tpu_custom_call.1} parent=1 // pred_check
      _
    $region23: #{tpu_custom_call.1} parent=1 // pred_check_branch
      %25 = sbr.rel (0) target = $region25
    $region24: #{tpu_custom_call.1} parent=1 // pred_region
      _
    $region25: #{tpu_custom_call.1} parent=1 // pred_fallthru
      _
    // Predicated region
    $region26: #{tpu_custom_call.1} parent=1 // pred_check
      _
    $region27: #{tpu_custom_call.1} parent=1 // pred_check_branch
      %27 = sbr.rel (0) target = $region29
    $region28: #{tpu_custom_call.1} parent=1 // pred_region
      _
    $region29: #{tpu_custom_call.1} parent=1 // pred_fallthru
      _
    %v29 = vld [vmem:[%s0] sm:$0xf]
    %v30 = vld [vmem:[%s0 + $0x4] sm:$0xf]
    %v31 = vld [vmem:[%s0 + $0x8] sm:$0xf]
    %v32 = vld [vmem:[%s0 + $0xc] sm:$0xf]
    %v33 = vld [vmem:[%s0 + $0x10] sm:$0xf]
    %v34 = vld [vmem:[%s0 + $0x14] sm:$0xf]
    %v35 = vld [vmem:[%s0 + $0x18] sm:$0x3]
    %v36 = vld [vmem:[%s1] sm:$0xf]
    %v37 = vld [vmem:[%s1 + $0x4] sm:$0xf]
    %v38 = vld [vmem:[%s1 + $0x8] sm:$0xf]
    %v39 = vld [vmem:[%s1 + $0xc] sm:$0xf]
    %v40 = vld [vmem:[%s1 + $0x10] sm:$0xf]
    %v41 = vld [vmem:[%s1 + $0x14] sm:$0xf]
    %v42 = vld [vmem:[%s1 + $0x18] sm:$0xf]
    %v43 = vld [vmem:[%s1 + $0x1c] sm:$0xf]
    %v44 = vld [vmem:[%s1 + $0x20] sm:$0xf]
    %v45 = vld [vmem:[%s1 + $0x24] sm:$0xf]
    %v46 = vld [vmem:[%s1 + $0x28] sm:$0xf]
    %v47 = vld [vmem:[%s1 + $0x2c] sm:$0xf]
    %v48 = vld [vmem:[%s1 + $0x30] sm:$0xf]
    %v49 = vld [vmem:[%s1 + $0x34] sm:$0xf]
    %v50 = vld [vmem:[%s1 + $0x38] sm:$0xf]
    %v51 = vld [vmem:[%s1 + $0x3c] sm:$0xf]
    %v52 = vld [vmem:[%s1 + $0x40] sm:$0xf]
    %v53 = vld [vmem:[%s1 + $0x44] sm:$0xf]
    %v54 = vld [vmem:[%s1 + $0x48] sm:$0xf]
    %v55 = vld [vmem:[%s1 + $0x4c] sm:$0xf]
    %v56 = vld [vmem:[%s1 + $0x50] sm:$0xf]
    %v57 = vld [vmem:[%s1 + $0x54] sm:$0xf]
    %v58 = vld [vmem:[%s1 + $0x58] sm:$0xf]
    %v59 = vld [vmem:[%s1 + $0x5c] sm:$0xf]
    %v60 = vld [vmem:[%s1 + $0x60] sm:$0xf]
    %v61 = vld [vmem:[%s1 + $0x64] sm:$0xf]
    %v62 = vld [vmem:[%s1 + $0x68] sm:$0xf]
    %v63 = vld [vmem:[%s1 + $0x6c] sm:$0xf]
    %v64 = vld [vmem:[%s1 + $0x70] sm:$0xf]
    %v65 = vld [vmem:[%s1 + $0x74] sm:$0xf]
    %v66 = vld [vmem:[%s1 + $0x78] sm:$0xf]
    %v67 = vld [vmem:[%s1 + $0x7c] sm:$0xf]
    %v68 = vld [vmem:[%s1 + $0x80] sm:$0xf]
    %v69 = vld [vmem:[%s1 + $0x84] sm:$0xf]
    %v70 = vld [vmem:[%s1 + $0x88] sm:$0xf]
    %v71 = vld [vmem:[%s1 + $0x8c] sm:$0xf]
    %v72 = vld [vmem:[%s1 + $0x90] sm:$0xf]
    %v73 = vld [vmem:[%s1 + $0x94] sm:$0xf]
    %v74 = vld [vmem:[%s1 + $0x98] sm:$0xf]
    %v75 = vld [vmem:[%s1 + $0x9c] sm:$0xf]
    %v76 = vld [vmem:[%s1 + $0xa0] sm:$0xf]
    %v77 = vld [vmem:[%s1 + $0xa4] sm:$0xf]
    %v78 = vld [vmem:[%s1 + $0xa8] sm:$0xf]
    %v79 = vld [vmem:[%s1 + $0xac] sm:$0xf]
    %v80 = vld [vmem:[%s1 + $0xb0] sm:$0xf]
    %v81 = vld [vmem:[%s1 + $0xb4] sm:$0xf]
    %v82 = vld [vmem:[%s1 + $0xb8] sm:$0xf]
    %v83 = vld [vmem:[%s1 + $0xbc] sm:$0xf]
    %v84 = vld [vmem:[%s1 + $0xc0] sm:$0xf]
    %v85 = vld [vmem:[%s1 + $0xc4] sm:$0xf]
    %v86 = vld [vmem:[%s1 + $0xc8] sm:$0xf]
    %v87 = vld [vmem:[%s1 + $0xcc] sm:$0xf]
    %v88 = vld [vmem:[%s1 + $0xd0] sm:$0xf]
    %v89 = vld [vmem:[%s1 + $0xd4] sm:$0xf]
    %v90 = vld [vmem:[%s1 + $0xd8] sm:$0xf]
    %v91 = vld [vmem:[%s1 + $0xdc] sm:$0xf]
    %v92 = vld [vmem:[%s1 + $0xe0] sm:$0xf]
    %v93 = vld [vmem:[%s1 + $0xe4] sm:$0xf]
    %v94 = vld [vmem:[%s1 + $0xe8] sm:$0xf]
    %v95 = vld [vmem:[%s1 + $0xec] sm:$0xf]
    %v96 = vld [vmem:[%s1 + $0xf0] sm:$0xf]
    %v97 = vld [vmem:[%s1 + $0xf4] sm:$0xf]
    %v98 = vld [vmem:[%s1 + $0xf8] sm:$0xf]
    %v99 = vld [vmem:[%s1 + $0xfc] sm:$0xf]
    %v100 = vld [vmem:[%s2] sm:$0xff]
    %v101 = vld [vmem:[%s2 + $0x8] sm:$0xff]
    %v102 = vld [vmem:[%s2 + $0x10] sm:$0xff]
    %v103 = vld [vmem:[%s2 + $0x18] sm:$0xff]
    %v104 = vld [vmem:[%s2 + $0x20] sm:$0xff]
    %v105 = vld [vmem:[%s2 + $0x28] sm:$0xff]
    %v106 = vld [vmem:[%s2 + $0x30] sm:$0xff]
    %v107 = vld [vmem:[%s2 + $0x38] sm:$0xff]
    %v108 = vld [vmem:[%s2 + $0x40] sm:$0xff]
    %v109 = vld [vmem:[%s2 + $0x48] sm:$0xff]
    %v110 = vld [vmem:[%s2 + $0x50] sm:$0xff]
    %v111 = vld [vmem:[%s2 + $0x58] sm:$0xff]
    %v112 = vld [vmem:[%s2 + $0x60] sm:$0xff]
    %v113 = vld [vmem:[%s2 + $0x68] sm:$0xff]
    %v114 = vld [vmem:[%s2 + $0x70] sm:$0xff]
    %v115 = vld [vmem:[%s2 + $0x78] sm:$0xff]
    %v116 = vld [vmem:[%s2 + $0x80] sm:$0xff]
    %v117 = vld [vmem:[%s2 + $0x88] sm:$0xff]
    %v118 = vld [vmem:[%s2 + $0x90] sm:$0xff]
    %v119 = vld [vmem:[%s2 + $0x98] sm:$0xff]
    %v120 = vld [vmem:[%s2 + $0xa0] sm:$0xff]
    %v121 = vld [vmem:[%s2 + $0xa8] sm:$0xff]
    %v122 = vld [vmem:[%s2 + $0xb0] sm:$0xff]
    %v123 = vld [vmem:[%s2 + $0xb8] sm:$0xff]
    %v124 = vld [vmem:[%s2 + $0xc0] sm:$0xff]
    %v125 = vld [vmem:[%s2 + $0xc8] sm:$0xff]
    %v126 = vld [vmem:[%s2 + $0xd0] sm:$0xff]
    %v127 = vld [vmem:[%s2 + $0xd8] sm:$0xff]
    %v128 = vld [vmem:[%s2 + $0xe0] sm:$0xff]
    %v129 = vld [vmem:[%s2 + $0xe8] sm:$0xff]
    %v130 = vld [vmem:[%s2 + $0xf0] sm:$0xff]
    %v131 = vld [vmem:[%s2 + $0xf8] sm:$0xff]
    %v132 = vld [vmem:[%s2 + $0x100] sm:$0xff]
    %v133 = vld [vmem:[%s2 + $0x108] sm:$0xff]
    %v134 = vld [vmem:[%s2 + $0x110] sm:$0xff]
    %v135 = vld [vmem:[%s2 + $0x118] sm:$0xff]
    %v136 = vld [vmem:[%s2 + $0x120] sm:$0xff]
    %v137 = vld [vmem:[%s2 + $0x128] sm:$0xff]
    %v138 = vld [vmem:[%s2 + $0x130] sm:$0xff]
    %v139 = vld [vmem:[%s2 + $0x138] sm:$0xff]
    %v140 = vld [vmem:[%s2 + $0x140] sm:$0xff]
    %v141 = vld [vmem:[%s2 + $0x148] sm:$0xff]
    %v142 = vld [vmem:[%s2 + $0x150] sm:$0xff]
    %v143 = vld [vmem:[%s2 + $0x158] sm:$0xff]
    %v144 = vld [vmem:[%s2 + $0x160] sm:$0xff]
    %v145 = vld [vmem:[%s2 + $0x168] sm:$0xff]
    %v146 = vld [vmem:[%s2 + $0x170] sm:$0xff]
    %v147 = vld [vmem:[%s2 + $0x178] sm:$0xff]
    %v148 = vld [vmem:[%s2 + $0x180] sm:$0xff]
    %v149 = vld [vmem:[%s2 + $0x188] sm:$0xff]
    %v150 = vld [vmem:[%s2 + $0x190] sm:$0xff]
    %v151 = vld [vmem:[%s2 + $0x198] sm:$0xff]
    %v152 = vld [vmem:[%s2 + $0x1a0] sm:$0xff]
    %v153 = vld [vmem:[%s2 + $0x1a8] sm:$0xff]
    %v154 = vld [vmem:[%s2 + $0x1b0] sm:$0xff]
    %v155 = vld [vmem:[%s2 + $0x1b8] sm:$0xff]
    %v156 = vld [vmem:[%s2 + $0x1c0] sm:$0xff]
    %v157 = vld [vmem:[%s2 + $0x1c8] sm:$0xff]
    %v158 = vld [vmem:[%s2 + $0x1d0] sm:$0xff]
    %v159 = vld [vmem:[%s2 + $0x1d8] sm:$0xff]
    %v160 = vld [vmem:[%s2 + $0x1e0] sm:$0xff]
    %v161 = vld [vmem:[%s2 + $0x1e8] sm:$0xff]
    %v162 = vld [vmem:[%s2 + $0x1f0] sm:$0xff]
    %v163 = vld [vmem:[%s2 + $0x1f8] sm:$0xff]
    %165 = vset.pattern.permute.xlu0 0
    %166 = vperm.xlu0 %165, %v100
    %v167 = vpop.permute.xlu0 %166
    %170 = vset.pattern.permute.xlu0 0
    %171 = vperm.xlu0 %170, %v101
    %v172 = vpop.permute.xlu0 %171
    %175 = vset.pattern.permute.xlu0 0
    %176 = vperm.xlu0 %175, %v102
    %v177 = vpop.permute.xlu0 %176
    %180 = vset.pattern.permute.xlu0 0
    %181 = vperm.xlu0 %180, %v103
    %v182 = vpop.permute.xlu0 %181
    %185 = vset.pattern.permute.xlu0 0
    %186 = vperm.xlu0 %185, %v104
    %v187 = vpop.permute.xlu0 %186
    %190 = vset.pattern.permute.xlu0 0
    %191 = vperm.xlu0 %190, %v105
    %v192 = vpop.permute.xlu0 %191
    %195 = vset.pattern.permute.xlu0 0
    %196 = vperm.xlu0 %195, %v106
    %v197 = vpop.permute.xlu0 %196
    %200 = vset.pattern.permute.xlu0 0
    %201 = vperm.xlu0 %200, %v107
    %v202 = vpop.permute.xlu0 %201
    %205 = vset.pattern.permute.xlu0 0
    %206 = vperm.xlu0 %205, %v108
    %v207 = vpop.permute.xlu0 %206
    %210 = vset.pattern.permute.xlu0 0
    %211 = vperm.xlu0 %210, %v109
    %v212 = vpop.permute.xlu0 %211
    %215 = vset.pattern.permute.xlu0 0
    %216 = vperm.xlu0 %215, %v110
    %v217 = vpop.permute.xlu0 %216
    %220 = vset.pattern.permute.xlu0 0
    %221 = vperm.xlu0 %220, %v111
    %v222 = vpop.permute.xlu0 %221
    %225 = vset.pattern.permute.xlu0 0
    %226 = vperm.xlu0 %225, %v112
    %v227 = vpop.permute.xlu0 %226
    %230 = vset.pattern.permute.xlu0 0
    %231 = vperm.xlu0 %230, %v113
    %v232 = vpop.permute.xlu0 %231
    %235 = vset.pattern.permute.xlu0 0
    %236 = vperm.xlu0 %235, %v114
    %v237 = vpop.permute.xlu0 %236
    %240 = vset.pattern.permute.xlu0 0
    %241 = vperm.xlu0 %240, %v115
    %v242 = vpop.permute.xlu0 %241
    %245 = vset.pattern.permute.xlu0 0
    %246 = vperm.xlu0 %245, %v116
    %v247 = vpop.permute.xlu0 %246
    %250 = vset.pattern.permute.xlu0 0
    %251 = vperm.xlu0 %250, %v117
    %v252 = vpop.permute.xlu0 %251
    %255 = vset.pattern.permute.xlu0 0
    %256 = vperm.xlu0 %255, %v118
    %v257 = vpop.permute.xlu0 %256
    %260 = vset.pattern.permute.xlu0 0
    %261 = vperm.xlu0 %260, %v119
    %v262 = vpop.permute.xlu0 %261
    %265 = vset.pattern.permute.xlu0 0
    %266 = vperm.xlu0 %265, %v120
    %v267 = vpop.permute.xlu0 %266
    %270 = vset.pattern.permute.xlu0 0
    %271 = vperm.xlu0 %270, %v121
    %v272 = vpop.permute.xlu0 %271
    %275 = vset.pattern.permute.xlu0 0
    %276 = vperm.xlu0 %275, %v122
    %v277 = vpop.permute.xlu0 %276
    %280 = vset.pattern.permute.xlu0 0
    %281 = vperm.xlu0 %280, %v123
    %v282 = vpop.permute.xlu0 %281
    %285 = vset.pattern.permute.xlu0 0
    %286 = vperm.xlu0 %285, %v124
    %v287 = vpop.permute.xlu0 %286
    %290 = vset.pattern.permute.xlu0 0
    %291 = vperm.xlu0 %290, %v125
    %v292 = vpop.permute.xlu0 %291
    %295 = vset.pattern.permute.xlu0 0
    %296 = vperm.xlu0 %295, %v126
    %v297 = vpop.permute.xlu0 %296
    %300 = vset.pattern.permute.xlu0 0
    %301 = vperm.xlu0 %300, %v127
    %v302 = vpop.permute.xlu0 %301
    %305 = vset.pattern.permute.xlu0 0
    %306 = vperm.xlu0 %305, %v128
    %v307 = vpop.permute.xlu0 %306
    %310 = vset.pattern.permute.xlu0 0
    %311 = vperm.xlu0 %310, %v129
    %v312 = vpop.permute.xlu0 %311
    %315 = vset.pattern.permute.xlu0 0
    %316 = vperm.xlu0 %315, %v130
    %v317 = vpop.permute.xlu0 %316
    %320 = vset.pattern.permute.xlu0 0
    %321 = vperm.xlu0 %320, %v131
    %v322 = vpop.permute.xlu0 %321
    %325 = vset.pattern.permute.xlu0 0
    %326 = vperm.xlu0 %325, %v132
    %v327 = vpop.permute.xlu0 %326
    %330 = vset.pattern.permute.xlu0 0
    %331 = vperm.xlu0 %330, %v133
    %v332 = vpop.permute.xlu0 %331
    %335 = vset.pattern.permute.xlu0 0
    %336 = vperm.xlu0 %335, %v134
    %v337 = vpop.permute.xlu0 %336
    %340 = vset.pattern.permute.xlu0 0
    %341 = vperm.xlu0 %340, %v135
    %v342 = vpop.permute.xlu0 %341
    %345 = vset.pattern.permute.xlu0 0
    %346 = vperm.xlu0 %345, %v136
    %v347 = vpop.permute.xlu0 %346
    %350 = vset.pattern.permute.xlu0 0
    %351 = vperm.xlu0 %350, %v137
    %v352 = vpop.permute.xlu0 %351
    %355 = vset.pattern.permute.xlu0 0
    %356 = vperm.xlu0 %355, %v138
    %v357 = vpop.permute.xlu0 %356
    %360 = vset.pattern.permute.xlu0 0
    %361 = vperm.xlu0 %360, %v139
    %v362 = vpop.permute.xlu0 %361
    %365 = vset.pattern.permute.xlu0 0
    %366 = vperm.xlu0 %365, %v140
    %v367 = vpop.permute.xlu0 %366
    %370 = vset.pattern.permute.xlu0 0
    %371 = vperm.xlu0 %370, %v141
    %v372 = vpop.permute.xlu0 %371
    %375 = vset.pattern.permute.xlu0 0
    %376 = vperm.xlu0 %375, %v142
    %v377 = vpop.permute.xlu0 %376
    %380 = vset.pattern.permute.xlu0 0
    %381 = vperm.xlu0 %380, %v143
    %v382 = vpop.permute.xlu0 %381
    %385 = vset.pattern.permute.xlu0 0
    %386 = vperm.xlu0 %385, %v144
    %v387 = vpop.permute.xlu0 %386
    %390 = vset.pattern.permute.xlu0 0
    %391 = vperm.xlu0 %390, %v145
    %v392 = vpop.permute.xlu0 %391
    %395 = vset.pattern.permute.xlu0 0
    %396 = vperm.xlu0 %395, %v146
    %v397 = vpop.permute.xlu0 %396
    %400 = vset.pattern.permute.xlu0 0
    %401 = vperm.xlu0 %400, %v147
    %v402 = vpop.permute.xlu0 %401
    %405 = vset.pattern.permute.xlu0 0
    %406 = vperm.xlu0 %405, %v148
    %v407 = vpop.permute.xlu0 %406
    %410 = vset.pattern.permute.xlu0 0
    %411 = vperm.xlu0 %410, %v149
    %v412 = vpop.permute.xlu0 %411
    %415 = vset.pattern.permute.xlu0 0
    %416 = vperm.xlu0 %415, %v150
    %v417 = vpop.permute.xlu0 %416
    %420 = vset.pattern.permute.xlu0 0
    %421 = vperm.xlu0 %420, %v151
    %v422 = vpop.permute.xlu0 %421
    %425 = vset.pattern.permute.xlu0 0
    %426 = vperm.xlu0 %425, %v152
    %v427 = vpop.permute.xlu0 %426
    %430 = vset.pattern.permute.xlu0 0
    %431 = vperm.xlu0 %430, %v153
    %v432 = vpop.permute.xlu0 %431
    %435 = vset.pattern.permute.xlu0 0
    %436 = vperm.xlu0 %435, %v154
    %v437 = vpop.permute.xlu0 %436
    %440 = vset.pattern.permute.xlu0 0
    %441 = vperm.xlu0 %440, %v155
    %v442 = vpop.permute.xlu0 %441
    %445 = vset.pattern.permute.xlu0 0
    %446 = vperm.xlu0 %445, %v156
    %v447 = vpop.permute.xlu0 %446
    %450 = vset.pattern.permute.xlu0 0
    %451 = vperm.xlu0 %450, %v157
    %v452 = vpop.permute.xlu0 %451
    %455 = vset.pattern.permute.xlu0 0
    %456 = vperm.xlu0 %455, %v158
    %v457 = vpop.permute.xlu0 %456
    %460 = vset.pattern.permute.xlu0 0
    %461 = vperm.xlu0 %460, %v159
    %v462 = vpop.permute.xlu0 %461
    %465 = vset.pattern.permute.xlu0 0
    %466 = vperm.xlu0 %465, %v160
    %v467 = vpop.permute.xlu0 %466
    %470 = vset.pattern.permute.xlu0 0
    %471 = vperm.xlu0 %470, %v161
    %v472 = vpop.permute.xlu0 %471
    %475 = vset.pattern.permute.xlu0 0
    %476 = vperm.xlu0 %475, %v162
    %v477 = vpop.permute.xlu0 %476
    %480 = vset.pattern.permute.xlu0 0
    %481 = vperm.xlu0 %480, %v163
    %v482 = vpop.permute.xlu0 %481
    %v548 = vunpack.c.l.b16 %v36
    %v549 = vunpack.c.l.b16 %v37
    %v550 = vunpack.c.l.b16 %v38
    %v551 = vunpack.c.l.b16 %v39
    %v552 = vunpack.c.l.b16 %v40
    %v553 = vunpack.c.l.b16 %v41
    %v554 = vunpack.c.l.b16 %v42
    %v555 = vunpack.c.l.b16 %v43
    %v556 = vunpack.c.l.b16 %v44
    %v557 = vunpack.c.l.b16 %v45
    %v558 = vunpack.c.l.b16 %v46
    %v559 = vunpack.c.l.b16 %v47
    %v560 = vunpack.c.l.b16 %v48
    %v561 = vunpack.c.l.b16 %v49
    %v562 = vunpack.c.l.b16 %v50
    %v563 = vunpack.c.l.b16 %v51
    %v564 = vunpack.c.l.b16 %v52
    %v565 = vunpack.c.l.b16 %v53
    %v566 = vunpack.c.l.b16 %v54
    %v567 = vunpack.c.l.b16 %v55
    %v568 = vunpack.c.l.b16 %v56
    %v569 = vunpack.c.l.b16 %v57
    %v570 = vunpack.c.l.b16 %v58
    %v571 = vunpack.c.l.b16 %v59
    %v572 = vunpack.c.l.b16 %v60
    %v573 = vunpack.c.l.b16 %v61
    %v574 = vunpack.c.l.b16 %v62
    %v575 = vunpack.c.l.b16 %v63
    %v576 = vunpack.c.l.b16 %v64
    %v577 = vunpack.c.l.b16 %v65
    %v578 = vunpack.c.l.b16 %v66
    %v579 = vunpack.c.l.b16 %v67
    %v580 = vunpack.c.l.b16 %v68
    %v581 = vunpack.c.l.b16 %v69
    %v582 = vunpack.c.l.b16 %v70
    %v583 = vunpack.c.l.b16 %v71
    %v584 = vunpack.c.l.b16 %v72
    %v585 = vunpack.c.l.b16 %v73
    %v586 = vunpack.c.l.b16 %v74
    %v587 = vunpack.c.l.b16 %v75
    %v588 = vunpack.c.l.b16 %v76
    %v589 = vunpack.c.l.b16 %v77
    %v590 = vunpack.c.l.b16 %v78
    %v591 = vunpack.c.l.b16 %v79
    %v592 = vunpack.c.l.b16 %v80
    %v593 = vunpack.c.l.b16 %v81
    %v594 = vunpack.c.l.b16 %v82
    %v595 = vunpack.c.l.b16 %v83
    %v596 = vunpack.c.l.b16 %v84
    %v597 = vunpack.c.l.b16 %v85
    %v598 = vunpack.c.l.b16 %v86
    %v599 = vunpack.c.l.b16 %v87
    %v600 = vunpack.c.l.b16 %v88
    %v601 = vunpack.c.l.b16 %v89
    %v602 = vunpack.c.l.b16 %v90
    %v603 = vunpack.c.l.b16 %v91
    %v604 = vunpack.c.l.b16 %v92
    %v605 = vunpack.c.l.b16 %v93
    %v606 = vunpack.c.l.b16 %v94
    %v607 = vunpack.c.l.b16 %v95
    %v608 = vunpack.c.l.b16 %v96
    %v609 = vunpack.c.l.b16 %v97
    %v610 = vunpack.c.l.b16 %v98
    %v611 = vunpack.c.l.b16 %v99
    %v612 = vpack.c.b16 %v549, %v548
    %v613 = vpack.c.b16 %v551, %v550
    %v614 = vpack.c.b16 %v553, %v552
    %v615 = vpack.c.b16 %v555, %v554
    %v616 = vpack.c.b16 %v557, %v556
    %v617 = vpack.c.b16 %v559, %v558
    %v618 = vpack.c.b16 %v561, %v560
    %v619 = vpack.c.b16 %v563, %v562
    %v620 = vpack.c.b16 %v565, %v564
    %v621 = vpack.c.b16 %v567, %v566
    %v622 = vpack.c.b16 %v569, %v568
    %v623 = vpack.c.b16 %v571, %v570
    %v624 = vpack.c.b16 %v573, %v572
    %v625 = vpack.c.b16 %v575, %v574
    %v626 = vpack.c.b16 %v577, %v576
    %v627 = vpack.c.b16 %v579, %v578
    %v628 = vpack.c.b16 %v581, %v580
    %v629 = vpack.c.b16 %v583, %v582
    %v630 = vpack.c.b16 %v585, %v584
    %v631 = vpack.c.b16 %v587, %v586
    %v632 = vpack.c.b16 %v589, %v588
    %v633 = vpack.c.b16 %v591, %v590
    %v634 = vpack.c.b16 %v593, %v592
    %v635 = vpack.c.b16 %v595, %v594
    %v636 = vpack.c.b16 %v597, %v596
    %v637 = vpack.c.b16 %v599, %v598
    %v638 = vpack.c.b16 %v601, %v600
    %v639 = vpack.c.b16 %v603, %v602
    %v640 = vpack.c.b16 %v605, %v604
    %v641 = vpack.c.b16 %v607, %v606
    %v642 = vpack.c.b16 %v609, %v608
    %v643 = vpack.c.b16 %v611, %v610
    %v651 = vunpack.c.l.b16 %v29
    %v652 = vunpack.c.l.b16 %v30
    %v653 = vunpack.c.l.b16 %v31
    %v654 = vunpack.c.l.b16 %v32
    %v655 = vunpack.c.l.b16 %v33
    %v656 = vunpack.c.l.b16 %v34
    %v657 = vunpack.c.l.b16 %v35
    %v658 = vpack.c.b16 %v652, %v651
    %v659 = vpack.c.b16 %v654, %v653
    %v660 = vpack.c.b16 %v656, %v655
    %v661 = vpack.c.b16 %v657, %v657
    %vm665 = vcmask 424960
    %v667 = vsel %vm665, %v612, 0
    %v670 = vsel %vm665, %v613, 0
    %v673 = vsel %vm665, %v614, 0
    %v676 = vsel %vm665, %v615, 0
    %v679 = vsel %vm665, %v616, 0
    %v682 = vsel %vm665, %v617, 0
    %v685 = vsel %vm665, %v618, 0
    %v688 = vsel %vm665, %v619, 0
    %v691 = vsel %vm665, %v620, 0
    %v694 = vsel %vm665, %v621, 0
    %v697 = vsel %vm665, %v622, 0
    %v700 = vsel %vm665, %v623, 0
    %v703 = vsel %vm665, %v624, 0
    %v706 = vsel %vm665, %v625, 0
    %v709 = vsel %vm665, %v626, 0
    %v712 = vsel %vm665, %v627, 0
    %v715 = vsel %vm665, %v628, 0
    %v718 = vsel %vm665, %v629, 0
    %v721 = vsel %vm665, %v630, 0
    %v724 = vsel %vm665, %v631, 0
    %v727 = vsel %vm665, %v632, 0
    %v730 = vsel %vm665, %v633, 0
    %v733 = vsel %vm665, %v634, 0
    %v736 = vsel %vm665, %v635, 0
    %v739 = vsel %vm665, %v636, 0
    %v742 = vsel %vm665, %v637, 0
    %v745 = vsel %vm665, %v638, 0
    %v748 = vsel %vm665, %v639, 0
    %v751 = vsel %vm665, %v640, 0
    %v754 = vsel %vm665, %v641, 0
    %v757 = vsel %vm665, %v642, 0
    %v760 = vsel %vm665, %v643, 0
    %vm762 = vcmask 1041408
    %v764 = vsel %vm762, %v661, 0
    %766 = vmatprep.subr.bf16.mxu0 0
    %767 = vmatpush1.bf16.msra.mxu0 %v658
    %768 = vmatprep.subr.bf16.mxu0 0
    %769 = vmatpush1.bf16.msra.mxu0 %v659
    %770 = vmatprep.subr.bf16.mxu0 0
    %771 = vmatpush1.bf16.msra.mxu0 %v660
    %772 = vmatprep.subr.bf16.mxu0 0
    %773 = vmatpush1.bf16.msra.mxu0 %v764
    %774 = vmatprep.subr.bf16.mxu0 0
    %775 = vmatpush1.bf16.msra.mxu0 0
    %776 = vmatprep.subr.bf16.mxu0 0
    %777 = vmatpush1.bf16.msra.mxu0 0
    %778 = vmatprep.subr.bf16.mxu0 0
    %779 = vmatpush1.bf16.msra.mxu0 0
    %780 = vmatprep.subr.bf16.mxu0 0
    %781 = vmatpush1.bf16.msra.mxu0 0
    %782 = vmatprep.subr.bf16.mxu0 0
    %783 = vmatpush1.bf16.msra.mxu0 0
    %784 = vmatprep.subr.bf16.mxu0 0
    %785 = vmatpush1.bf16.msra.mxu0 0
    %786 = vmatprep.subr.bf16.mxu0 0
    %787 = vmatpush1.bf16.msra.mxu0 0
    %788 = vmatprep.subr.bf16.mxu0 0
    %789 = vmatpush1.bf16.msra.mxu0 0
    %790 = vmatprep.subr.bf16.mxu0 0
    %791 = vmatpush1.bf16.msra.mxu0 0
    %792 = vmatprep.subr.bf16.mxu0 0
    %793 = vmatpush1.bf16.msra.mxu0 0
    %794 = vmatprep.subr.bf16.mxu0 0
    %795 = vmatpush1.bf16.msra.mxu0 0
    %796 = vmatprep.subr.bf16.mxu0 0
    %797 = vmatpush1.bf16.msra.mxu0 0
    %798 = vmatprep.mubr.bf16.mxu0 0
    %799 = vmatmul.mubr.bf16.gmra.mrb[0].mxu0 %v667
    %v800 = vpop.f32.mrb[0].mxu0
    %v801 = vadd.f32 %v167, %v800
    %v802 = vpop.f32.mrb[0].mxu0
    %v803 = vpop.f32.mrb[0].mxu0
    %v804 = vadd.f32 %v172, %v803
    %v805 = vpop.f32.mrb[0].mxu0
    %806 = vmatprep.mubr.bf16.mxu0 0
    %807 = vmatmul.mubr.bf16.gmra.mrb[0].mxu0 %v670
    %v808 = vpop.f32.mrb[0].mxu0
    %v809 = vadd.f32 %v177, %v808
    %v810 = vpop.f32.mrb[0].mxu0
    %v811 = vpop.f32.mrb[0].mxu0
    %v812 = vadd.f32 %v182, %v811
    %v813 = vpop.f32.mrb[0].mxu0
    %814 = vmatprep.mubr.bf16.mxu0 0
    %815 = vmatmul.mubr.bf16.gmra.mrb[0].mxu0 %v673
    %v816 = vpop.f32.mrb[0].mxu0
    %v817 = vadd.f32 %v187, %v816
    %v818 = vpop.f32.mrb[0].mxu0
    %v819 = vpop.f32.mrb[0].mxu0
    %v820 = vadd.f32 %v192, %v819
    %v821 = vpop.f32.mrb[0].mxu0
    %822 = vmatprep.mubr.bf16.mxu0 0
    %823 = vmatmul.mubr.bf16.gmra.mrb[0].mxu0 %v676
    %v824 = vpop.f32.mrb[0].mxu0
    %v825 = vadd.f32 %v197, %v824
    %v826 = vpop.f32.mrb[0].mxu0
    %v827 = vpop.f32.mrb[0].mxu0
    %v828 = vadd.f32 %v202, %v827
    %v829 = vpop.f32.mrb[0].mxu0
    %830 = vmatprep.mubr.bf16.mxu0 0
    %831 = vmatmul.mubr.bf16.gmra.mrb[0].mxu0 %v679
    %v832 = vpop.f32.mrb[0].mxu0
    %v833 = vadd.f32 %v207, %v832
    %v834 = vpop.f32.mrb[0].mxu0
    %v835 = vpop.f32.mrb[0].mxu0
    %v836 = vadd.f32 %v212, %v835
    %v837 = vpop.f32.mrb[0].mxu0
    %838 = vmatprep.mubr.bf16.mxu0 0
    %839 = vmatmul.mubr.bf16.gmra.mrb[0].mxu0 %v682
    %v840 = vpop.f32.mrb[0].mxu0
    %v841 = vadd.f32 %v217, %v840
    %v842 = vpop.f32.mrb[0].mxu0
    %v843 = vpop.f32.mrb[0].mxu0
    %v844 = vadd.f32 %v222, %v843
    %v845 = vpop.f32.mrb[0].mxu0
    %846 = vmatprep.mubr.bf16.mxu0 0
    %847 = vmatmul.mubr.bf16.gmra.mrb[0].mxu0 %v685
    %v848 = vpop.f32.mrb[0].mxu0
    %v849 = vadd.f32 %v227, %v848
    %v850 = vpop.f32.mrb[0].mxu0
    %v851 = vpop.f32.mrb[0].mxu0
    %v852 = vadd.f32 %v232, %v851
    %v853 = vpop.f32.mrb[0].mxu0
    %854 = vmatprep.mubr.bf16.mxu0 0
    %855 = vmatmul.mubr.bf16.gmra.mrb[0].mxu0 %v688
    %v856 = vpop.f32.mrb[0].mxu0
    %v857 = vadd.f32 %v237, %v856
    %v858 = vpop.f32.mrb[0].mxu0
    %v859 = vpop.f32.mrb[0].mxu0
    %v860 = vadd.f32 %v242, %v859
    %v861 = vpop.f32.mrb[0].mxu0
    %862 = vmatprep.mubr.bf16.mxu0 0
    %863 = vmatmul.mubr.bf16.gmra.mrb[0].mxu0 %v691
    %v864 = vpop.f32.mrb[0].mxu0
    %v865 = vadd.f32 %v247, %v864
    %v866 = vpop.f32.mrb[0].mxu0
    %v867 = vpop.f32.mrb[0].mxu0
    %v868 = vadd.f32 %v252, %v867
    %v869 = vpop.f32.mrb[0].mxu0
    %870 = vmatprep.mubr.bf16.mxu0 0
    %871 = vmatmul.mubr.bf16.gmra.mrb[0].mxu0 %v694
    %v872 = vpop.f32.mrb[0].mxu0
    %v873 = vadd.f32 %v257, %v872
    %v874 = vpop.f32.mrb[0].mxu0
    %v875 = vpop.f32.mrb[0].mxu0
    %v876 = vadd.f32 %v262, %v875
    %v877 = vpop.f32.mrb[0].mxu0
    %878 = vmatprep.mubr.bf16.mxu0 0
    %879 = vmatmul.mubr.bf16.gmra.mrb[0].mxu0 %v697
    %v880 = vpop.f32.mrb[0].mxu0
    %v881 = vadd.f32 %v267, %v880
    %v882 = vpop.f32.mrb[0].mxu0
    %v883 = vpop.f32.mrb[0].mxu0
    %v884 = vadd.f32 %v272, %v883
    %v885 = vpop.f32.mrb[0].mxu0
    %886 = vmatprep.mubr.bf16.mxu0 0
    %887 = vmatmul.mubr.bf16.gmra.mrb[0].mxu0 %v700
    %v888 = vpop.f32.mrb[0].mxu0
    %v889 = vadd.f32 %v277, %v888
    %v890 = vpop.f32.mrb[0].mxu0
    %v891 = vpop.f32.mrb[0].mxu0
    %v892 = vadd.f32 %v282, %v891
    %v893 = vpop.f32.mrb[0].mxu0
    %894 = vmatprep.mubr.bf16.mxu0 0
    %895 = vmatmul.mubr.bf16.gmra.mrb[0].mxu0 %v703
    %v896 = vpop.f32.mrb[0].mxu0
    %v897 = vadd.f32 %v287, %v896
    %v898 = vpop.f32.mrb[0].mxu0
    %v899 = vpop.f32.mrb[0].mxu0
    %v900 = vadd.f32 %v292, %v899
    %v901 = vpop.f32.mrb[0].mxu0
    %902 = vmatprep.mubr.bf16.mxu0 0
    %903 = vmatmul.mubr.bf16.gmra.mrb[0].mxu0 %v706
    %v904 = vpop.f32.mrb[0].mxu0
    %v905 = vadd.f32 %v297, %v904
    %v906 = vpop.f32.mrb[0].mxu0
    %v907 = vpop.f32.mrb[0].mxu0
    %v908 = vadd.f32 %v302, %v907
    %v909 = vpop.f32.mrb[0].mxu0
    %910 = vmatprep.mubr.bf16.mxu0 0
    %911 = vmatmul.mubr.bf16.gmra.mrb[0].mxu0 %v709
    %v912 = vpop.f32.mrb[0].mxu0
    %v913 = vadd.f32 %v307, %v912
    %v914 = vpop.f32.mrb[0].mxu0
    %v915 = vpop.f32.mrb[0].mxu0
    %v916 = vadd.f32 %v312, %v915
    %v917 = vpop.f32.mrb[0].mxu0
    %918 = vmatprep.mubr.bf16.mxu0 0
    %919 = vmatmul.mubr.bf16.gmra.mrb[0].mxu0 %v712
    %v920 = vpop.f32.mrb[0].mxu0
    %v921 = vadd.f32 %v317, %v920
    %v922 = vpop.f32.mrb[0].mxu0
    %v923 = vpop.f32.mrb[0].mxu0
    %v924 = vadd.f32 %v322, %v923
    %v925 = vpop.f32.mrb[0].mxu0
    %926 = vmatprep.mubr.bf16.mxu0 0
    %927 = vmatmul.mubr.bf16.gmra.mrb[0].mxu0 %v715
    %v928 = vpop.f32.mrb[0].mxu0
    %v929 = vadd.f32 %v327, %v928
    %v930 = vpop.f32.mrb[0].mxu0
    %v931 = vpop.f32.mrb[0].mxu0
    %v932 = vadd.f32 %v332, %v931
    %v933 = vpop.f32.mrb[0].mxu0
    %934 = vmatprep.mubr.bf16.mxu0 0
    %935 = vmatmul.mubr.bf16.gmra.mrb[0].mxu0 %v718
    %v936 = vpop.f32.mrb[0].mxu0
    %v937 = vadd.f32 %v337, %v936
    %v938 = vpop.f32.mrb[0].mxu0
    %v939 = vpop.f32.mrb[0].mxu0
    %v940 = vadd.f32 %v342, %v939
    %v941 = vpop.f32.mrb[0].mxu0
    %942 = vmatprep.mubr.bf16.mxu0 0
    %943 = vmatmul.mubr.bf16.gmra.mrb[0].mxu0 %v721
    %v944 = vpop.f32.mrb[0].mxu0
    %v945 = vadd.f32 %v347, %v944
    %v946 = vpop.f32.mrb[0].mxu0
    %v947 = vpop.f32.mrb[0].mxu0
    %v948 = vadd.f32 %v352, %v947
    %v949 = vpop.f32.mrb[0].mxu0
    %950 = vmatprep.mubr.bf16.mxu0 0
    %951 = vmatmul.mubr.bf16.gmra.mrb[0].mxu0 %v724
    %v952 = vpop.f32.mrb[0].mxu0
    %v953 = vadd.f32 %v357, %v952
    %v954 = vpop.f32.mrb[0].mxu0
    %v955 = vpop.f32.mrb[0].mxu0
    %v956 = vadd.f32 %v362, %v955
    %v957 = vpop.f32.mrb[0].mxu0
    %958 = vmatprep.mubr.bf16.mxu0 0
    %959 = vmatmul.mubr.bf16.gmra.mrb[0].mxu0 %v727
    %v960 = vpop.f32.mrb[0].mxu0
    %v961 = vadd.f32 %v367, %v960
    %v962 = vpop.f32.mrb[0].mxu0
    %v963 = vpop.f32.mrb[0].mxu0
    %v964 = vadd.f32 %v372, %v963
    %v965 = vpop.f32.mrb[0].mxu0
    %966 = vmatprep.mubr.bf16.mxu0 0
    %967 = vmatmul.mubr.bf16.gmra.mrb[0].mxu0 %v730
    %v968 = vpop.f32.mrb[0].mxu0
    %v969 = vadd.f32 %v377, %v968
    %v970 = vpop.f32.mrb[0].mxu0
    %v971 = vpop.f32.mrb[0].mxu0
    %v972 = vadd.f32 %v382, %v971
    %v973 = vpop.f32.mrb[0].mxu0
    %974 = vmatprep.mubr.bf16.mxu0 0
    %975 = vmatmul.mubr.bf16.gmra.mrb[0].mxu0 %v733
    %v976 = vpop.f32.mrb[0].mxu0
    %v977 = vadd.f32 %v387, %v976
    %v978 = vpop.f32.mrb[0].mxu0
    %v979 = vpop.f32.mrb[0].mxu0
    %v980 = vadd.f32 %v392, %v979
    %v981 = vpop.f32.mrb[0].mxu0
    %982 = vmatprep.mubr.bf16.mxu0 0
    %983 = vmatmul.mubr.bf16.gmra.mrb[0].mxu0 %v736
    %v984 = vpop.f32.mrb[0].mxu0
    %v985 = vadd.f32 %v397, %v984
    %v986 = vpop.f32.mrb[0].mxu0
    %v987 = vpop.f32.mrb[0].mxu0
    %v988 = vadd.f32 %v402, %v987
    %v989 = vpop.f32.mrb[0].mxu0
    %990 = vmatprep.mubr.bf16.mxu0 0
    %991 = vmatmul.mubr.bf16.gmra.mrb[0].mxu0 %v739
    %v992 = vpop.f32.mrb[0].mxu0
    %v993 = vadd.f32 %v407, %v992
    %v994 = vpop.f32.mrb[0].mxu0
    %v995 = vpop.f32.mrb[0].mxu0
    %v996 = vadd.f32 %v412, %v995
    %v997 = vpop.f32.mrb[0].mxu0
    %998 = vmatprep.mubr.bf16.mxu0 0
    %999 = vmatmul.mubr.bf16.gmra.mrb[0].mxu0 %v742
    %v1000 = vpop.f32.mrb[0].mxu0
    %v1001 = vadd.f32 %v417, %v1000
    %v1002 = vpop.f32.mrb[0].mxu0
    %v1003 = vpop.f32.mrb[0].mxu0
    %v1004 = vadd.f32 %v422, %v1003
    %v1005 = vpop.f32.mrb[0].mxu0
    %1006 = vmatprep.mubr.bf16.mxu0 0
    %1007 = vmatmul.mubr.bf16.gmra.mrb[0].mxu0 %v745
    %v1008 = vpop.f32.mrb[0].mxu0
    %v1009 = vadd.f32 %v427, %v1008
    %v1010 = vpop.f32.mrb[0].mxu0
    %v1011 = vpop.f32.mrb[0].mxu0
    %v1012 = vadd.f32 %v432, %v1011
    %v1013 = vpop.f32.mrb[0].mxu0
    %1014 = vmatprep.mubr.bf16.mxu0 0
    %1015 = vmatmul.mubr.bf16.gmra.mrb[0].mxu0 %v748
    %v1016 = vpop.f32.mrb[0].mxu0
    %v1017 = vadd.f32 %v437, %v1016
    %v1018 = vpop.f32.mrb[0].mxu0
    %v1019 = vpop.f32.mrb[0].mxu0
    %v1020 = vadd.f32 %v442, %v1019
    %v1021 = vpop.f32.mrb[0].mxu0
    %1022 = vmatprep.mubr.bf16.mxu0 0
    %1023 = vmatmul.mubr.bf16.gmra.mrb[0].mxu0 %v751
    %v1024 = vpop.f32.mrb[0].mxu0
    %v1025 = vadd.f32 %v447, %v1024
    %v1026 = vpop.f32.mrb[0].mxu0
    %v1027 = vpop.f32.mrb[0].mxu0
    %v1028 = vadd.f32 %v452, %v1027
    %v1029 = vpop.f32.mrb[0].mxu0
    %1030 = vmatprep.mubr.bf16.mxu0 0
    %1031 = vmatmul.mubr.bf16.gmra.mrb[0].mxu0 %v754
    %v1032 = vpop.f32.mrb[0].mxu0
    %v1033 = vadd.f32 %v457, %v1032
    %v1034 = vpop.f32.mrb[0].mxu0
    %v1035 = vpop.f32.mrb[0].mxu0
    %v1036 = vadd.f32 %v462, %v1035
    %v1037 = vpop.f32.mrb[0].mxu0
    %1038 = vmatprep.mubr.bf16.mxu0 0
    %1039 = vmatmul.mubr.bf16.gmra.mrb[0].mxu0 %v757
    %v1040 = vpop.f32.mrb[0].mxu0
    %v1041 = vadd.f32 %v467, %v1040
    %v1042 = vpop.f32.mrb[0].mxu0
    %v1043 = vpop.f32.mrb[0].mxu0
    %v1044 = vadd.f32 %v472, %v1043
    %v1045 = vpop.f32.mrb[0].mxu0
    %1046 = vmatprep.mubr.bf16.mxu0 0
    %1047 = vmatmul.mubr.bf16.gmra.mrb[0].mxu0 %v760
    %v1048 = vpop.f32.mrb[0].mxu0
    %v1049 = vadd.f32 %v477, %v1048
    %v1050 = vpop.f32.mrb[0].mxu0
    %v1051 = vpop.f32.mrb[0].mxu0
    %v1052 = vadd.f32 %v482, %v1051
    %v1053 = vpop.f32.mrb[0].mxu0
    %1054 = vdwg.mxu0
    %v1055 = vmax.f32 %v801, 0.0
    %v1056 = vmax.f32 %v804, 0.0
    %v1057 = vmax.f32 %v809, 0.0
    %v1058 = vmax.f32 %v812, 0.0
    %v1059 = vmax.f32 %v817, 0.0
    %v1060 = vmax.f32 %v820, 0.0
    %v1061 = vmax.f32 %v825, 0.0
    %v1062 = vmax.f32 %v828, 0.0
    %v1063 = vmax.f32 %v833, 0.0
    %v1064 = vmax.f32 %v836, 0.0
    %v1065 = vmax.f32 %v841, 0.0
    %v1066 = vmax.f32 %v844, 0.0
    %v1067 = vmax.f32 %v849, 0.0
    %v1068 = vmax.f32 %v852, 0.0
    %v1069 = vmax.f32 %v857, 0.0
    %v1070 = vmax.f32 %v860, 0.0
    %v1071 = vmax.f32 %v865, 0.0
    %v1072 = vmax.f32 %v868, 0.0
    %v1073 = vmax.f32 %v873, 0.0
    %v1074 = vmax.f32 %v876, 0.0
    %v1075 = vmax.f32 %v881, 0.0
    %v1076 = vmax.f32 %v884, 0.0
    %v1077 = vmax.f32 %v889, 0.0
    %v1078 = vmax.f32 %v892, 0.0
    %v1079 = vmax.f32 %v897, 0.0
    %v1080 = vmax.f32 %v900, 0.0
    %v1081 = vmax.f32 %v905, 0.0
    %v1082 = vmax.f32 %v908, 0.0
    %v1083 = vmax.f32 %v913, 0.0
    %v1084 = vmax.f32 %v916, 0.0
    %v1085 = vmax.f32 %v921, 0.0
    %v1086 = vmax.f32 %v924, 0.0
    %v1087 = vmax.f32 %v929, 0.0
    %v1088 = vmax.f32 %v932, 0.0
    %v1089 = vmax.f32 %v937, 0.0
    %v1090 = vmax.f32 %v940, 0.0
    %v1091 = vmax.f32 %v945, 0.0
    %v1092 = vmax.f32 %v948, 0.0
    %v1093 = vmax.f32 %v953, 0.0
    %v1094 = vmax.f32 %v956, 0.0
    %v1095 = vmax.f32 %v961, 0.0
    %v1096 = vmax.f32 %v964, 0.0
    %v1097 = vmax.f32 %v969, 0.0
    %v1098 = vmax.f32 %v972, 0.0
    %v1099 = vmax.f32 %v977, 0.0
    %v1100 = vmax.f32 %v980, 0.0
    %v1101 = vmax.f32 %v985, 0.0
    %v1102 = vmax.f32 %v988, 0.0
    %v1103 = vmax.f32 %v993, 0.0
    %v1104 = vmax.f32 %v996, 0.0
    %v1105 = vmax.f32 %v1001, 0.0
    %v1106 = vmax.f32 %v1004, 0.0
    %v1107 = vmax.f32 %v1009, 0.0
    %v1108 = vmax.f32 %v1012, 0.0
    %v1109 = vmax.f32 %v1017, 0.0
    %v1110 = vmax.f32 %v1020, 0.0
    %v1111 = vmax.f32 %v1025, 0.0
    %v1112 = vmax.f32 %v1028, 0.0
    %v1113 = vmax.f32 %v1033, 0.0
    %v1114 = vmax.f32 %v1036, 0.0
    %v1115 = vmax.f32 %v1041, 0.0
    %v1116 = vmax.f32 %v1044, 0.0
    %v1117 = vmax.f32 %v1049, 0.0
    %v1118 = vmax.f32 %v1052, 0.0
    %v1119 = vld [vmem:[%s3] sm:$0xff]
    %v1120 = vld [vmem:[%s3 + $0x8] sm:$0xff]
    %v1121 = vld [vmem:[%s3 + $0x10] sm:$0xff]
    %v1122 = vld [vmem:[%s3 + $0x18] sm:$0xff]
    %v1123 = vld [vmem:[%s3 + $0x20] sm:$0xff]
    %v1124 = vld [vmem:[%s3 + $0x28] sm:$0xff]
    %v1125 = vld [vmem:[%s3 + $0x30] sm:$0xff]
    %v1126 = vld [vmem:[%s3 + $0x38] sm:$0xff]
    %v1127 = vld [vmem:[%s3 + $0x40] sm:$0xff]
    %v1128 = vld [vmem:[%s3 + $0x48] sm:$0xff]
    %v1129 = vld [vmem:[%s3 + $0x50] sm:$0xff]
    %v1130 = vld [vmem:[%s3 + $0x58] sm:$0xff]
    %v1131 = vld [vmem:[%s3 + $0x60] sm:$0xff]
    %v1132 = vld [vmem:[%s3 + $0x68] sm:$0xff]
    %v1133 = vld [vmem:[%s3 + $0x70] sm:$0xff]
    %v1134 = vld [vmem:[%s3 + $0x78] sm:$0xff]
    %v1135 = vld [vmem:[%s3 + $0x80] sm:$0xff]
    %v1136 = vld [vmem:[%s3 + $0x88] sm:$0xff]
    %v1137 = vld [vmem:[%s3 + $0x90] sm:$0xff]
    %v1138 = vld [vmem:[%s3 + $0x98] sm:$0xff]
    %v1139 = vld [vmem:[%s3 + $0xa0] sm:$0xff]
    %v1140 = vld [vmem:[%s3 + $0xa8] sm:$0xff]
    %v1141 = vld [vmem:[%s3 + $0xb0] sm:$0xff]
    %v1142 = vld [vmem:[%s3 + $0xb8] sm:$0xff]
    %v1143 = vld [vmem:[%s3 + $0xc0] sm:$0xff]
    %v1144 = vld [vmem:[%s3 + $0xc8] sm:$0xff]
    %v1145 = vld [vmem:[%s3 + $0xd0] sm:$0xff]
    %v1146 = vld [vmem:[%s3 + $0xd8] sm:$0xff]
    %v1147 = vld [vmem:[%s3 + $0xe0] sm:$0xff]
    %v1148 = vld [vmem:[%s3 + $0xe8] sm:$0xff]
    %v1149 = vld [vmem:[%s3 + $0xf0] sm:$0xff]
    %v1150 = vld [vmem:[%s3 + $0xf8] sm:$0xff]
    %v1151 = vld [vmem:[%s3 + $0x100] sm:$0xff]
    %v1152 = vld [vmem:[%s3 + $0x108] sm:$0xff]
    %v1153 = vld [vmem:[%s3 + $0x110] sm:$0xff]
    %v1154 = vld [vmem:[%s3 + $0x118] sm:$0xff]
    %v1155 = vld [vmem:[%s3 + $0x120] sm:$0xff]
    %v1156 = vld [vmem:[%s3 + $0x128] sm:$0xff]
    %v1157 = vld [vmem:[%s3 + $0x130] sm:$0xff]
    %v1158 = vld [vmem:[%s3 + $0x138] sm:$0xff]
    %v1159 = vld [vmem:[%s3 + $0x140] sm:$0xff]
    %v1160 = vld [vmem:[%s3 + $0x148] sm:$0xff]
    %v1161 = vld [vmem:[%s3 + $0x150] sm:$0xff]
    %v1162 = vld [vmem:[%s3 + $0x158] sm:$0xff]
    %v1163 = vld [vmem:[%s3 + $0x160] sm:$0xff]
    %v1164 = vld [vmem:[%s3 + $0x168] sm:$0xff]
    %v1165 = vld [vmem:[%s3 + $0x170] sm:$0xff]
    %v1166 = vld [vmem:[%s3 + $0x178] sm:$0xff]
    %v1167 = vld [vmem:[%s3 + $0x180] sm:$0xff]
    %v1168 = vld [vmem:[%s3 + $0x188] sm:$0xff]
    %v1169 = vld [vmem:[%s3 + $0x190] sm:$0xff]
    %v1170 = vld [vmem:[%s3 + $0x198] sm:$0xff]
    %v1171 = vld [vmem:[%s3 + $0x1a0] sm:$0xff]
    %v1172 = vld [vmem:[%s3 + $0x1a8] sm:$0xff]
    %v1173 = vld [vmem:[%s3 + $0x1b0] sm:$0xff]
    %v1174 = vld [vmem:[%s3 + $0x1b8] sm:$0xff]
    %v1175 = vld [vmem:[%s3 + $0x1c0] sm:$0xff]
    %v1176 = vld [vmem:[%s3 + $0x1c8] sm:$0xff]
    %v1177 = vld [vmem:[%s3 + $0x1d0] sm:$0xff]
    %v1178 = vld [vmem:[%s3 + $0x1d8] sm:$0xff]
    %v1179 = vld [vmem:[%s3 + $0x1e0] sm:$0xff]
    %v1180 = vld [vmem:[%s3 + $0x1e8] sm:$0xff]
    %v1181 = vld [vmem:[%s3 + $0x1f0] sm:$0xff]
    %v1182 = vld [vmem:[%s3 + $0x1f8] sm:$0xff]
    %v1183 = vpack.c.bf16 %v1056, %v1055
    %v1184 = vpack.c.bf16 %v1058, %v1057
    %v1185 = vpack.c.bf16 %v1060, %v1059
    %v1186 = vpack.c.bf16 %v1062, %v1061
    %v1187 = vpack.c.bf16 %v1064, %v1063
    %v1188 = vpack.c.bf16 %v1066, %v1065
    %v1189 = vpack.c.bf16 %v1068, %v1067
    %v1190 = vpack.c.bf16 %v1070, %v1069
    %v1191 = vpack.c.bf16 %v1072, %v1071
    %v1192 = vpack.c.bf16 %v1074, %v1073
    %v1193 = vpack.c.bf16 %v1076, %v1075
    %v1194 = vpack.c.bf16 %v1078, %v1077
    %v1195 = vpack.c.bf16 %v1080, %v1079
    %v1196 = vpack.c.bf16 %v1082, %v1081
    %v1197 = vpack.c.bf16 %v1084, %v1083
    %v1198 = vpack.c.bf16 %v1086, %v1085
    %v1199 = vpack.c.bf16 %v1088, %v1087
    %v1200 = vpack.c.bf16 %v1090, %v1089
    %v1201 = vpack.c.bf16 %v1092, %v1091
    %v1202 = vpack.c.bf16 %v1094, %v1093
    %v1203 = vpack.c.bf16 %v1096, %v1095
    %v1204 = vpack.c.bf16 %v1098, %v1097
    %v1205 = vpack.c.bf16 %v1100, %v1099
    %v1206 = vpack.c.bf16 %v1102, %v1101
    %v1207 = vpack.c.bf16 %v1104, %v1103
    %v1208 = vpack.c.bf16 %v1106, %v1105
    %v1209 = vpack.c.bf16 %v1108, %v1107
    %v1210 = vpack.c.bf16 %v1110, %v1109
    %v1211 = vpack.c.bf16 %v1112, %v1111
    %v1212 = vpack.c.bf16 %v1114, %v1113
    %v1213 = vpack.c.bf16 %v1116, %v1115
    %v1214 = vpack.c.bf16 %v1118, %v1117
    %v1215 = vld [vmem:[%s4] sm:$0xff]
    %v1216 = vld [vmem:[%s4 + $0x8] sm:$0xff]
    %v1217 = vld [vmem:[%s4 + $0x10] sm:$0xff]
    %v1218 = vld [vmem:[%s4 + $0x18] sm:$0xff]
    %v1219 = vld [vmem:[%s4 + $0x20] sm:$0xff]
    %v1220 = vld [vmem:[%s4 + $0x28] sm:$0xff]
    %v1221 = vld [vmem:[%s4 + $0x30] sm:$0xff]
    %v1222 = vld [vmem:[%s4 + $0x38] sm:$0xff]
    %v1223 = vld [vmem:[%s4 + $0x40] sm:$0xff]
    %v1224 = vld [vmem:[%s4 + $0x48] sm:$0xff]
    %v1225 = vld [vmem:[%s4 + $0x50] sm:$0xff]
    %v1226 = vld [vmem:[%s4 + $0x58] sm:$0xff]
    %v1227 = vld [vmem:[%s4 + $0x60] sm:$0xff]
    %v1228 = vld [vmem:[%s4 + $0x68] sm:$0xff]
    %v1229 = vld [vmem:[%s4 + $0x70] sm:$0xff]
    %v1230 = vld [vmem:[%s4 + $0x78] sm:$0xff]
    %v1231 = vld [vmem:[%s4 + $0x80] sm:$0xff]
    %v1232 = vld [vmem:[%s4 + $0x88] sm:$0xff]
    %v1233 = vld [vmem:[%s4 + $0x90] sm:$0xff]
    %v1234 = vld [vmem:[%s4 + $0x98] sm:$0xff]
    %v1235 = vld [vmem:[%s4 + $0xa0] sm:$0xff]
    %v1236 = vld [vmem:[%s4 + $0xa8] sm:$0xff]
    %v1237 = vld [vmem:[%s4 + $0xb0] sm:$0xff]
    %v1238 = vld [vmem:[%s4 + $0xb8] sm:$0xff]
    %v1239 = vld [vmem:[%s4 + $0xc0] sm:$0xff]
    %v1240 = vld [vmem:[%s4 + $0xc8] sm:$0xff]
    %v1241 = vld [vmem:[%s4 + $0xd0] sm:$0xff]
    %v1242 = vld [vmem:[%s4 + $0xd8] sm:$0xff]
    %v1243 = vld [vmem:[%s4 + $0xe0] sm:$0xff]
    %v1244 = vld [vmem:[%s4 + $0xe8] sm:$0xff]
    %v1245 = vld [vmem:[%s4 + $0xf0] sm:$0xff]
    %v1246 = vld [vmem:[%s4 + $0xf8] sm:$0xff]
    %1248 = vset.pattern.permute.xlu0 0
    %1249 = vperm.xlu0 %1248, %v1215
    %v1250 = vpop.permute.xlu0 %1249
    %1253 = vset.pattern.permute.xlu0 0
    %1254 = vperm.xlu0 %1253, %v1216
    %v1255 = vpop.permute.xlu0 %1254
    %1258 = vset.pattern.permute.xlu0 0
    %1259 = vperm.xlu0 %1258, %v1217
    %v1260 = vpop.permute.xlu0 %1259
    %1263 = vset.pattern.permute.xlu0 0
    %1264 = vperm.xlu0 %1263, %v1218
    %v1265 = vpop.permute.xlu0 %1264
    %1268 = vset.pattern.permute.xlu0 0
    %1269 = vperm.xlu0 %1268, %v1219
    %v1270 = vpop.permute.xlu0 %1269
    %1273 = vset.pattern.permute.xlu0 0
    %1274 = vperm.xlu0 %1273, %v1220
    %v1275 = vpop.permute.xlu0 %1274
    %1278 = vset.pattern.permute.xlu0 0
    %1279 = vperm.xlu0 %1278, %v1221
    %v1280 = vpop.permute.xlu0 %1279
    %1283 = vset.pattern.permute.xlu0 0
    %1284 = vperm.xlu0 %1283, %v1222
    %v1285 = vpop.permute.xlu0 %1284
    %1288 = vset.pattern.permute.xlu0 0
    %1289 = vperm.xlu0 %1288, %v1223
    %v1290 = vpop.permute.xlu0 %1289
    %1293 = vset.pattern.permute.xlu0 0
    %1294 = vperm.xlu0 %1293, %v1224
    %v1295 = vpop.permute.xlu0 %1294
    %1298 = vset.pattern.permute.xlu0 0
    %1299 = vperm.xlu0 %1298, %v1225
    %v1300 = vpop.permute.xlu0 %1299
    %1303 = vset.pattern.permute.xlu0 0
    %1304 = vperm.xlu0 %1303, %v1226
    %v1305 = vpop.permute.xlu0 %1304
    %1308 = vset.pattern.permute.xlu0 0
    %1309 = vperm.xlu0 %1308, %v1227
    %v1310 = vpop.permute.xlu0 %1309
    %1313 = vset.pattern.permute.xlu0 0
    %1314 = vperm.xlu0 %1313, %v1228
    %v1315 = vpop.permute.xlu0 %1314
    %1318 = vset.pattern.permute.xlu0 0
    %1319 = vperm.xlu0 %1318, %v1229
    %v1320 = vpop.permute.xlu0 %1319
    %1323 = vset.pattern.permute.xlu0 0
    %1324 = vperm.xlu0 %1323, %v1230
    %v1325 = vpop.permute.xlu0 %1324
    %1328 = vset.pattern.permute.xlu0 0
    %1329 = vperm.xlu0 %1328, %v1231
    %v1330 = vpop.permute.xlu0 %1329
    %1333 = vset.pattern.permute.xlu0 0
    %1334 = vperm.xlu0 %1333, %v1232
    %v1335 = vpop.permute.xlu0 %1334
    %1338 = vset.pattern.permute.xlu0 0
    %1339 = vperm.xlu0 %1338, %v1233
    %v1340 = vpop.permute.xlu0 %1339
    %1343 = vset.pattern.permute.xlu0 0
    %1344 = vperm.xlu0 %1343, %v1234
    %v1345 = vpop.permute.xlu0 %1344
    %1348 = vset.pattern.permute.xlu0 0
    %1349 = vperm.xlu0 %1348, %v1235
    %v1350 = vpop.permute.xlu0 %1349
    %1353 = vset.pattern.permute.xlu0 0
    %1354 = vperm.xlu0 %1353, %v1236
    %v1355 = vpop.permute.xlu0 %1354
    %1358 = vset.pattern.permute.xlu0 0
    %1359 = vperm.xlu0 %1358, %v1237
    %v1360 = vpop.permute.xlu0 %1359
    %1363 = vset.pattern.permute.xlu0 0
    %1364 = vperm.xlu0 %1363, %v1238
    %v1365 = vpop.permute.xlu0 %1364
    %1368 = vset.pattern.permute.xlu0 0
    %1369 = vperm.xlu0 %1368, %v1239
    %v1370 = vpop.permute.xlu0 %1369
    %1373 = vset.pattern.permute.xlu0 0
    %1374 = vperm.xlu0 %1373, %v1240
    %v1375 = vpop.permute.xlu0 %1374
    %1378 = vset.pattern.permute.xlu0 0
    %1379 = vperm.xlu0 %1378, %v1241
    %v1380 = vpop.permute.xlu0 %1379
    %1383 = vset.pattern.permute.xlu0 0
    %1384 = vperm.xlu0 %1383, %v1242
    %v1385 = vpop.permute.xlu0 %1384
    %1388 = vset.pattern.permute.xlu0 0
    %1389 = vperm.xlu0 %1388, %v1243
    %v1390 = vpop.permute.xlu0 %1389
    %1393 = vset.pattern.permute.xlu0 0
    %1394 = vperm.xlu0 %1393, %v1244
    %v1395 = vpop.permute.xlu0 %1394
    %1398 = vset.pattern.permute.xlu0 0
    %1399 = vperm.xlu0 %1398, %v1245
    %v1400 = vpop.permute.xlu0 %1399
    %1403 = vset.pattern.permute.xlu0 0
    %1404 = vperm.xlu0 %1403, %v1246
    %v1405 = vpop.permute.xlu0 %1404
    %v1471 = vunpack.c.l.b16 %v1119
    %v1472 = vunpack.c.h.b16 %v1119
    %v1473 = vunpack.c.l.b16 %v1120
    %v1474 = vunpack.c.h.b16 %v1120
    %v1475 = vunpack.c.l.b16 %v1121
    %v1476 = vunpack.c.h.b16 %v1121
    %v1477 = vunpack.c.l.b16 %v1122
    %v1478 = vunpack.c.h.b16 %v1122
    %v1479 = vunpack.c.l.b16 %v1123
    %v1480 = vunpack.c.h.b16 %v1123
    %v1481 = vunpack.c.l.b16 %v1124
    %v1482 = vunpack.c.h.b16 %v1124
    %v1483 = vunpack.c.l.b16 %v1125
    %v1484 = vunpack.c.h.b16 %v1125
    %v1485 = vunpack.c.l.b16 %v1126
    %v1486 = vunpack.c.h.b16 %v1126
    %v1487 = vunpack.c.l.b16 %v1127
    %v1488 = vunpack.c.h.b16 %v1127
    %v1489 = vunpack.c.l.b16 %v1128
    %v1490 = vunpack.c.h.b16 %v1128
    %v1491 = vunpack.c.l.b16 %v1129
    %v1492 = vunpack.c.h.b16 %v1129
    %v1493 = vunpack.c.l.b16 %v1130
    %v1494 = vunpack.c.h.b16 %v1130
    %v1495 = vunpack.c.l.b16 %v1131
    %v1496 = vunpack.c.h.b16 %v1131
    %v1497 = vunpack.c.l.b16 %v1132
    %v1498 = vunpack.c.h.b16 %v1132
    %v1499 = vunpack.c.l.b16 %v1133
    %v1500 = vunpack.c.h.b16 %v1133
    %v1501 = vunpack.c.l.b16 %v1134
    %v1502 = vunpack.c.h.b16 %v1134
    %v1503 = vunpack.c.l.b16 %v1135
    %v1504 = vunpack.c.h.b16 %v1135
    %v1505 = vunpack.c.l.b16 %v1136
    %v1506 = vunpack.c.h.b16 %v1136
    %v1507 = vunpack.c.l.b16 %v1137
    %v1508 = vunpack.c.h.b16 %v1137
    %v1509 = vunpack.c.l.b16 %v1138
    %v1510 = vunpack.c.h.b16 %v1138
    %v1511 = vunpack.c.l.b16 %v1139
    %v1512 = vunpack.c.h.b16 %v1139
    %v1513 = vunpack.c.l.b16 %v1140
    %v1514 = vunpack.c.h.b16 %v1140
    %v1515 = vunpack.c.l.b16 %v1141
    %v1516 = vunpack.c.h.b16 %v1141
    %v1517 = vunpack.c.l.b16 %v1142
    %v1518 = vunpack.c.h.b16 %v1142
    %v1519 = vunpack.c.l.b16 %v1143
    %v1520 = vunpack.c.h.b16 %v1143
    %v1521 = vunpack.c.l.b16 %v1144
    %v1522 = vunpack.c.h.b16 %v1144
    %v1523 = vunpack.c.l.b16 %v1145
    %v1524 = vunpack.c.h.b16 %v1145
    %v1525 = vunpack.c.l.b16 %v1146
    %v1526 = vunpack.c.h.b16 %v1146
    %v1527 = vunpack.c.l.b16 %v1147
    %v1528 = vunpack.c.h.b16 %v1147
    %v1529 = vunpack.c.l.b16 %v1148
    %v1530 = vunpack.c.h.b16 %v1148
    %v1531 = vunpack.c.l.b16 %v1149
    %v1532 = vunpack.c.h.b16 %v1149
    %v1533 = vunpack.c.l.b16 %v1150
    %v1534 = vunpack.c.h.b16 %v1150
    %v1535 = vunpack.c.l.b16 %v1151
    %v1536 = vunpack.c.h.b16 %v1151
    %v1537 = vunpack.c.l.b16 %v1152
    %v1538 = vunpack.c.h.b16 %v1152
    %v1539 = vunpack.c.l.b16 %v1153
    %v1540 = vunpack.c.h.b16 %v1153
    %v1541 = vunpack.c.l.b16 %v1154
    %v1542 = vunpack.c.h.b16 %v1154
    %v1543 = vunpack.c.l.b16 %v1155
    %v1544 = vunpack.c.h.b16 %v1155
    %v1545 = vunpack.c.l.b16 %v1156
    %v1546 = vunpack.c.h.b16 %v1156
    %v1547 = vunpack.c.l.b16 %v1157
    %v1548 = vunpack.c.h.b16 %v1157
    %v1549 = vunpack.c.l.b16 %v1158
    %v1550 = vunpack.c.h.b16 %v1158
    %v1551 = vunpack.c.l.b16 %v1159
    %v1552 = vunpack.c.h.b16 %v1159
    %v1553 = vunpack.c.l.b16 %v1160
    %v1554 = vunpack.c.h.b16 %v1160
    %v1555 = vunpack.c.l.b16 %v1161
    %v1556 = vunpack.c.h.b16 %v1161
    %v1557 = vunpack.c.l.b16 %v1162
    %v1558 = vunpack.c.h.b16 %v1162
    %v1559 = vunpack.c.l.b16 %v1163
    %v1560 = vunpack.c.h.b16 %v1163
    %v1561 = vunpack.c.l.b16 %v1164
    %v1562 = vunpack.c.h.b16 %v1164
    %v1563 = vunpack.c.l.b16 %v1165
    %v1564 = vunpack.c.h.b16 %v1165
    %v1565 = vunpack.c.l.b16 %v1166
    %v1566 = vunpack.c.h.b16 %v1166
    %v1567 = vunpack.c.l.b16 %v1167
    %v1568 = vunpack.c.h.b16 %v1167
    %v1569 = vunpack.c.l.b16 %v1168
    %v1570 = vunpack.c.h.b16 %v1168
    %v1571 = vunpack.c.l.b16 %v1169
    %v1572 = vunpack.c.h.b16 %v1169
    %v1573 = vunpack.c.l.b16 %v1170
    %v1574 = vunpack.c.h.b16 %v1170
    %v1575 = vunpack.c.l.b16 %v1171
    %v1576 = vunpack.c.h.b16 %v1171
    %v1577 = vunpack.c.l.b16 %v1172
    %v1578 = vunpack.c.h.b16 %v1172
    %v1579 = vunpack.c.l.b16 %v1173
    %v1580 = vunpack.c.h.b16 %v1173
    %v1581 = vunpack.c.l.b16 %v1174
    %v1582 = vunpack.c.h.b16 %v1174
    %v1583 = vunpack.c.l.b16 %v1175
    %v1584 = vunpack.c.h.b16 %v1175
    %v1585 = vunpack.c.l.b16 %v1176
    %v1586 = vunpack.c.h.b16 %v1176
    %v1587 = vunpack.c.l.b16 %v1177
    %v1588 = vunpack.c.h.b16 %v1177
    %v1589 = vunpack.c.l.b16 %v1178
    %v1590 = vunpack.c.h.b16 %v1178
    %v1591 = vunpack.c.l.b16 %v1179
    %v1592 = vunpack.c.h.b16 %v1179
    %v1593 = vunpack.c.l.b16 %v1180
    %v1594 = vunpack.c.h.b16 %v1180
    %v1595 = vunpack.c.l.b16 %v1181
    %v1596 = vunpack.c.h.b16 %v1181
    %v1597 = vunpack.c.l.b16 %v1182
    %v1598 = vunpack.c.h.b16 %v1182
    %v1599 = vpack.c.b16 %v1475, %v1471
    %v1600 = vpack.c.b16 %v1476, %v1472
    %v1601 = vpack.c.b16 %v1477, %v1473
    %v1602 = vpack.c.b16 %v1478, %v1474
    %v1603 = vpack.c.b16 %v1483, %v1479
    %v1604 = vpack.c.b16 %v1484, %v1480
    %v1605 = vpack.c.b16 %v1485, %v1481
    %v1606 = vpack.c.b16 %v1486, %v1482
    %v1607 = vpack.c.b16 %v1491, %v1487
    %v1608 = vpack.c.b16 %v1492, %v1488
    %v1609 = vpack.c.b16 %v1493, %v1489
    %v1610 = vpack.c.b16 %v1494, %v1490
    %v1611 = vpack.c.b16 %v1499, %v1495
    %v1612 = vpack.c.b16 %v1500, %v1496
    %v1613 = vpack.c.b16 %v1501, %v1497
    %v1614 = vpack.c.b16 %v1502, %v1498
    %v1615 = vpack.c.b16 %v1507, %v1503
    %v1616 = vpack.c.b16 %v1508, %v1504
    %v1617 = vpack.c.b16 %v1509, %v1505
    %v1618 = vpack.c.b16 %v1510, %v1506
    %v1619 = vpack.c.b16 %v1515, %v1511
    %v1620 = vpack.c.b16 %v1516, %v1512
    %v1621 = vpack.c.b16 %v1517, %v1513
    %v1622 = vpack.c.b16 %v1518, %v1514
    %v1623 = vpack.c.b16 %v1523, %v1519
    %v1624 = vpack.c.b16 %v1524, %v1520
    %v1625 = vpack.c.b16 %v1525, %v1521
    %v1626 = vpack.c.b16 %v1526, %v1522
    %v1627 = vpack.c.b16 %v1531, %v1527
    %v1628 = vpack.c.b16 %v1532, %v1528
    %v1629 = vpack.c.b16 %v1533, %v1529
    %v1630 = vpack.c.b16 %v1534, %v1530
    %v1631 = vpack.c.b16 %v1539, %v1535
    %v1632 = vpack.c.b16 %v1540, %v1536
    %v1633 = vpack.c.b16 %v1541, %v1537
    %v1634 = vpack.c.b16 %v1542, %v1538
    %v1635 = vpack.c.b16 %v1547, %v1543
    %v1636 = vpack.c.b16 %v1548, %v1544
    %v1637 = vpack.c.b16 %v1549, %v1545
    %v1638 = vpack.c.b16 %v1550, %v1546
    %v1639 = vpack.c.b16 %v1555, %v1551
    %v1640 = vpack.c.b16 %v1556, %v1552
    %v1641 = vpack.c.b16 %v1557, %v1553
    %v1642 = vpack.c.b16 %v1558, %v1554
    %v1643 = vpack.c.b16 %v1563, %v1559
    %v1644 = vpack.c.b16 %v1564, %v1560
    %v1645 = vpack.c.b16 %v1565, %v1561
    %v1646 = vpack.c.b16 %v1566, %v1562
    %v1647 = vpack.c.b16 %v1571, %v1567
    %v1648 = vpack.c.b16 %v1572, %v1568
    %v1649 = vpack.c.b16 %v1573, %v1569
    %v1650 = vpack.c.b16 %v1574, %v1570
    %v1651 = vpack.c.b16 %v1579, %v1575
    %v1652 = vpack.c.b16 %v1580, %v1576
    %v1653 = vpack.c.b16 %v1581, %v1577
    %v1654 = vpack.c.b16 %v1582, %v1578
    %v1655 = vpack.c.b16 %v1587, %v1583
    %v1656 = vpack.c.b16 %v1588, %v1584
    %v1657 = vpack.c.b16 %v1589, %v1585
    %v1658 = vpack.c.b16 %v1590, %v1586
    %v1659 = vpack.c.b16 %v1595, %v1591
    %v1660 = vpack.c.b16 %v1596, %v1592
    %v1661 = vpack.c.b16 %v1597, %v1593
    %v1662 = vpack.c.b16 %v1598, %v1594
    %1727 = vmatprep.subr.bf16.mxu0 0
    %1728 = vmatpush1.bf16.msra.mxu0 %v1183
    %1729 = vmatprep.subr.bf16.mxu0 0
    %1730 = vmatpush1.bf16.msra.mxu0 %v1184
    %1731 = vmatprep.subr.bf16.mxu0 0
    %1732 = vmatpush1.bf16.msra.mxu0 %v1185
    %1733 = vmatprep.subr.bf16.mxu0 0
    %1734 = vmatpush1.bf16.msra.mxu0 %v1186
    %1735 = vmatprep.subr.bf16.mxu0 0
    %1736 = vmatpush1.bf16.msra.mxu0 %v1187
    %1737 = vmatprep.subr.bf16.mxu0 0
    %1738 = vmatpush1.bf16.msra.mxu0 %v1188
    %1739 = vmatprep.subr.bf16.mxu0 0
    %1740 = vmatpush1.bf16.msra.mxu0 %v1189
    %1741 = vmatprep.subr.bf16.mxu0 0
    %1742 = vmatpush1.bf16.msra.mxu0 %v1190
    %1743 = vmatprep.subr.bf16.mxu0 0
    %1744 = vmatpush1.bf16.msra.mxu0 %v1191
    %1745 = vmatprep.subr.bf16.mxu0 0
    %1746 = vmatpush1.bf16.msra.mxu0 %v1192
    %1747 = vmatprep.subr.bf16.mxu0 0
    %1748 = vmatpush1.bf16.msra.mxu0 %v1193
    %1749 = vmatprep.subr.bf16.mxu0 0
    %1750 = vmatpush1.bf16.msra.mxu0 %v1194
    %1751 = vmatprep.subr.bf16.mxu0 0
    %1752 = vmatpush1.bf16.msra.mxu0 %v1195
    %1753 = vmatprep.subr.bf16.mxu0 0
    %1754 = vmatpush1.bf16.msra.mxu0 %v1196
    %1755 = vmatprep.subr.bf16.mxu0 0
    %1756 = vmatpush1.bf16.msra.mxu0 %v1197
    %1757 = vmatprep.subr.bf16.mxu0 0
    %1758 = vmatpush1.bf16.msra.mxu0 %v1198
    %1759 = vmatprep.mubr.bf16.mxu0 %v1600
    %1760 = vmatmul.mubr.bf16.gmra.mrb[0].mxu0 %v1599
    %v1761 = vpop.f32.mrb[0].mxu0
    %v1762 = vadd.f32 %v1250, %v1761
    %v1763 = vpop.f32.mrb[0].mxu0
    %v1764 = vpop.f32.mrb[0].mxu0
    %v1765 = vadd.f32 %v1255, %v1764
    %v1766 = vpop.f32.mrb[0].mxu0
    %1767 = vmatprep.mubr.bf16.mxu0 %v1604
    %1768 = vmatmul.mubr.bf16.gmra.mrb[0].mxu0 %v1603
    %v1769 = vpop.f32.mrb[0].mxu0
    %v1770 = vadd.f32 %v1260, %v1769
    %v1771 = vpop.f32.mrb[0].mxu0
    %v1772 = vpop.f32.mrb[0].mxu0
    %v1773 = vadd.f32 %v1265, %v1772
    %v1774 = vpop.f32.mrb[0].mxu0
    %1775 = vmatprep.mubr.bf16.mxu0 %v1608
    %1776 = vmatmul.mubr.bf16.gmra.mrb[0].mxu0 %v1607
    %v1777 = vpop.f32.mrb[0].mxu0
    %v1778 = vadd.f32 %v1270, %v1777
    %v1779 = vpop.f32.mrb[0].mxu0
    %v1780 = vpop.f32.mrb[0].mxu0
    %v1781 = vadd.f32 %v1275, %v1780
    %v1782 = vpop.f32.mrb[0].mxu0
    %1783 = vmatprep.mubr.bf16.mxu0 %v1612
    %1784 = vmatmul.mubr.bf16.gmra.mrb[0].mxu0 %v1611
    %v1785 = vpop.f32.mrb[0].mxu0
    %v1786 = vadd.f32 %v1280, %v1785
    %v1787 = vpop.f32.mrb[0].mxu0
    %v1788 = vpop.f32.mrb[0].mxu0
    %v1789 = vadd.f32 %v1285, %v1788
    %v1790 = vpop.f32.mrb[0].mxu0
    %1791 = vmatprep.mubr.bf16.mxu0 %v1616
    %1792 = vmatmul.mubr.bf16.gmra.mrb[0].mxu0 %v1615
    %v1793 = vpop.f32.mrb[0].mxu0
    %v1794 = vadd.f32 %v1290, %v1793
    %v1795 = vpop.f32.mrb[0].mxu0
    %v1796 = vpop.f32.mrb[0].mxu0
    %v1797 = vadd.f32 %v1295, %v1796
    %v1798 = vpop.f32.mrb[0].mxu0
    %1799 = vmatprep.mubr.bf16.mxu0 %v1620
    %1800 = vmatmul.mubr.bf16.gmra.mrb[0].mxu0 %v1619
    %v1801 = vpop.f32.mrb[0].mxu0
    %v1802 = vadd.f32 %v1300, %v1801
    %v1803 = vpop.f32.mrb[0].mxu0
    %v1804 = vpop.f32.mrb[0].mxu0
    %v1805 = vadd.f32 %v1305, %v1804
    %v1806 = vpop.f32.mrb[0].mxu0
    %1807 = vmatprep.mubr.bf16.mxu0 %v1624
    %1808 = vmatmul.mubr.bf16.gmra.mrb[0].mxu0 %v1623
    %v1809 = vpop.f32.mrb[0].mxu0
    %v1810 = vadd.f32 %v1310, %v1809
    %v1811 = vpop.f32.mrb[0].mxu0
    %v1812 = vpop.f32.mrb[0].mxu0
    %v1813 = vadd.f32 %v1315, %v1812
    %v1814 = vpop.f32.mrb[0].mxu0
    %1815 = vmatprep.mubr.bf16.mxu0 %v1628
    %1816 = vmatmul.mubr.bf16.gmra.mrb[0].mxu0 %v1627
    %v1817 = vpop.f32.mrb[0].mxu0
    %v1818 = vadd.f32 %v1320, %v1817
    %v1819 = vpop.f32.mrb[0].mxu0
    %v1820 = vpop.f32.mrb[0].mxu0
    %v1821 = vadd.f32 %v1325, %v1820
    %v1822 = vpop.f32.mrb[0].mxu0
    %1823 = vmatprep.mubr.bf16.mxu0 %v1632
    %1824 = vmatmul.mubr.bf16.gmra.mrb[0].mxu0 %v1631
    %v1825 = vpop.f32.mrb[0].mxu0
    %v1826 = vadd.f32 %v1330, %v1825
    %v1827 = vpop.f32.mrb[0].mxu0
    %v1828 = vpop.f32.mrb[0].mxu0
    %v1829 = vadd.f32 %v1335, %v1828
    %v1830 = vpop.f32.mrb[0].mxu0
    %1831 = vmatprep.mubr.bf16.mxu0 %v1636
    %1832 = vmatmul.mubr.bf16.gmra.mrb[0].mxu0 %v1635
    %v1833 = vpop.f32.mrb[0].mxu0
    %v1834 = vadd.f32 %v1340, %v1833
    %v1835 = vpop.f32.mrb[0].mxu0
    %v1836 = vpop.f32.mrb[0].mxu0
    %v1837 = vadd.f32 %v1345, %v1836
    %v1838 = vpop.f32.mrb[0].mxu0
    %1839 = vmatprep.mubr.bf16.mxu0 %v1640
    %1840 = vmatmul.mubr.bf16.gmra.mrb[0].mxu0 %v1639
    %v1841 = vpop.f32.mrb[0].mxu0
    %v1842 = vadd.f32 %v1350, %v1841
    %v1843 = vpop.f32.mrb[0].mxu0
    %v1844 = vpop.f32.mrb[0].mxu0
    %v1845 = vadd.f32 %v1355, %v1844
    %v1846 = vpop.f32.mrb[0].mxu0
    %1847 = vmatprep.mubr.bf16.mxu0 %v1644
    %1848 = vmatmul.mubr.bf16.gmra.mrb[0].mxu0 %v1643
    %v1849 = vpop.f32.mrb[0].mxu0
    %v1850 = vadd.f32 %v1360, %v1849
    %v1851 = vpop.f32.mrb[0].mxu0
    %v1852 = vpop.f32.mrb[0].mxu0
    %v1853 = vadd.f32 %v1365, %v1852
    %v1854 = vpop.f32.mrb[0].mxu0
    %1855 = vmatprep.mubr.bf16.mxu0 %v1648
    %1856 = vmatmul.mubr.bf16.gmra.mrb[0].mxu0 %v1647
    %v1857 = vpop.f32.mrb[0].mxu0
    %v1858 = vadd.f32 %v1370, %v1857
    %v1859 = vpop.f32.mrb[0].mxu0
    %v1860 = vpop.f32.mrb[0].mxu0
    %v1861 = vadd.f32 %v1375, %v1860
    %v1862 = vpop.f32.mrb[0].mxu0
    %1863 = vmatprep.mubr.bf16.mxu0 %v1652
    %1864 = vmatmul.mubr.bf16.gmra.mrb[0].mxu0 %v1651
    %v1865 = vpop.f32.mrb[0].mxu0
    %v1866 = vadd.f32 %v1380, %v1865
    %v1867 = vpop.f32.mrb[0].mxu0
    %v1868 = vpop.f32.mrb[0].mxu0
    %v1869 = vadd.f32 %v1385, %v1868
    %v1870 = vpop.f32.mrb[0].mxu0
    %1871 = vmatprep.mubr.bf16.mxu0 %v1656
    %1872 = vmatmul.mubr.bf16.gmra.mrb[0].mxu0 %v1655
    %v1873 = vpop.f32.mrb[0].mxu0
    %v1874 = vadd.f32 %v1390, %v1873
    %v1875 = vpop.f32.mrb[0].mxu0
    %v1876 = vpop.f32.mrb[0].mxu0
    %v1877 = vadd.f32 %v1395, %v1876
    %v1878 = vpop.f32.mrb[0].mxu0
    %1879 = vmatprep.mubr.bf16.mxu0 %v1660
    %1880 = vmatmul.mubr.bf16.gmra.mrb[0].mxu0 %v1659
    %v1881 = vpop.f32.mrb[0].mxu0
    %v1882 = vadd.f32 %v1400, %v1881
    %v1883 = vpop.f32.mrb[0].mxu0
    %v1884 = vpop.f32.mrb[0].mxu0
    %v1885 = vadd.f32 %v1405, %v1884
    %v1886 = vpop.f32.mrb[0].mxu0
    %1887 = vdwg.mxu0
    %1888 = vmatprep.subr.bf16.mxu0 0
    %1889 = vmatpush1.bf16.msra.mxu0 %v1199
    %1890 = vmatprep.subr.bf16.mxu0 0
    %1891 = vmatpush1.bf16.msra.mxu0 %v1200
    %1892 = vmatprep.subr.bf16.mxu0 0
    %1893 = vmatpush1.bf16.msra.mxu0 %v1201
    %1894 = vmatprep.subr.bf16.mxu0 0
    %1895 = vmatpush1.bf16.msra.mxu0 %v1202
    %1896 = vmatprep.subr.bf16.mxu0 0
    %1897 = vmatpush1.bf16.msra.mxu0 %v1203
    %1898 = vmatprep.subr.bf16.mxu0 0
    %1899 = vmatpush1.bf16.msra.mxu0 %v1204
    %1900 = vmatprep.subr.bf16.mxu0 0
    %1901 = vmatpush1.bf16.msra.mxu0 %v1205
    %1902 = vmatprep.subr.bf16.mxu0 0
    %1903 = vmatpush1.bf16.msra.mxu0 %v1206
    %1904 = vmatprep.subr.bf16.mxu0 0
    %1905 = vmatpush1.bf16.msra.mxu0 %v1207
    %1906 = vmatprep.subr.bf16.mxu0 0
    %1907 = vmatpush1.bf16.msra.mxu0 %v1208
    %1908 = vmatprep.subr.bf16.mxu0 0
    %1909 = vmatpush1.bf16.msra.mxu0 %v1209
    %1910 = vmatprep.subr.bf16.mxu0 0
    %1911 = vmatpush1.bf16.msra.mxu0 %v1210
    %1912 = vmatprep.subr.bf16.mxu0 0
    %1913 = vmatpush1.bf16.msra.mxu0 %v1211
    %1914 = vmatprep.subr.bf16.mxu0 0
    %1915 = vmatpush1.bf16.msra.mxu0 %v1212
    %1916 = vmatprep.subr.bf16.mxu0 0
    %1917 = vmatpush1.bf16.msra.mxu0 %v1213
    %1918 = vmatprep.subr.bf16.mxu0 0
    %1919 = vmatpush1.bf16.msra.mxu0 %v1214
    %1920 = vmatprep.mubr.bf16.mxu0 %v1602
    %1921 = vmatmul.mubr.bf16.gmra.mrb[0].mxu0 %v1601
    %v1922 = vpop.f32.mrb[0].mxu0
    %v1923 = vadd.f32 %v1762, %v1922
    %v1924 = vpop.f32.mrb[0].mxu0
    %v1925 = vpop.f32.mrb[0].mxu0
    %v1926 = vadd.f32 %v1765, %v1925
    %v1927 = vpop.f32.mrb[0].mxu0
    %1928 = vmatprep.mubr.bf16.mxu0 %v1606
    %1929 = vmatmul.mubr.bf16.gmra.mrb[0].mxu0 %v1605
    %v1930 = vpop.f32.mrb[0].mxu0
    %v1931 = vadd.f32 %v1770, %v1930
    %v1932 = vpop.f32.mrb[0].mxu0
    %v1933 = vpop.f32.mrb[0].mxu0
    %v1934 = vadd.f32 %v1773, %v1933
    %v1935 = vpop.f32.mrb[0].mxu0
    %1936 = vmatprep.mubr.bf16.mxu0 %v1610
    %1937 = vmatmul.mubr.bf16.gmra.mrb[0].mxu0 %v1609
    %v1938 = vpop.f32.mrb[0].mxu0
    %v1939 = vadd.f32 %v1778, %v1938
    %v1940 = vpop.f32.mrb[0].mxu0
    %v1941 = vpop.f32.mrb[0].mxu0
    %v1942 = vadd.f32 %v1781, %v1941
    %v1943 = vpop.f32.mrb[0].mxu0
    %1944 = vmatprep.mubr.bf16.mxu0 %v1614
    %1945 = vmatmul.mubr.bf16.gmra.mrb[0].mxu0 %v1613
    %v1946 = vpop.f32.mrb[0].mxu0
    %v1947 = vadd.f32 %v1786, %v1946
    %v1948 = vpop.f32.mrb[0].mxu0
    %v1949 = vpop.f32.mrb[0].mxu0
    %v1950 = vadd.f32 %v1789, %v1949
    %v1951 = vpop.f32.mrb[0].mxu0
    %1952 = vmatprep.mubr.bf16.mxu0 %v1618
    %1953 = vmatmul.mubr.bf16.gmra.mrb[0].mxu0 %v1617
    %v1954 = vpop.f32.mrb[0].mxu0
    %v1955 = vadd.f32 %v1794, %v1954
    %v1956 = vpop.f32.mrb[0].mxu0
    %v1957 = vpop.f32.mrb[0].mxu0
    %v1958 = vadd.f32 %v1797, %v1957
    %v1959 = vpop.f32.mrb[0].mxu0
    %1960 = vmatprep.mubr.bf16.mxu0 %v1622
    %1961 = vmatmul.mubr.bf16.gmra.mrb[0].mxu0 %v1621
    %v1962 = vpop.f32.mrb[0].mxu0
    %v1963 = vadd.f32 %v1802, %v1962
    %v1964 = vpop.f32.mrb[0].mxu0
    %v1965 = vpop.f32.mrb[0].mxu0
    %v1966 = vadd.f32 %v1805, %v1965
    %v1967 = vpop.f32.mrb[0].mxu0
    %1968 = vmatprep.mubr.bf16.mxu0 %v1626
    %1969 = vmatmul.mubr.bf16.gmra.mrb[0].mxu0 %v1625
    %v1970 = vpop.f32.mrb[0].mxu0
    %v1971 = vadd.f32 %v1810, %v1970
    %v1972 = vpop.f32.mrb[0].mxu0
    %v1973 = vpop.f32.mrb[0].mxu0
    %v1974 = vadd.f32 %v1813, %v1973
    %v1975 = vpop.f32.mrb[0].mxu0
    %1976 = vmatprep.mubr.bf16.mxu0 %v1630
    %1977 = vmatmul.mubr.bf16.gmra.mrb[0].mxu0 %v1629
    %v1978 = vpop.f32.mrb[0].mxu0
    %v1979 = vadd.f32 %v1818, %v1978
    %v1980 = vpop.f32.mrb[0].mxu0
    %v1981 = vpop.f32.mrb[0].mxu0
    %v1982 = vadd.f32 %v1821, %v1981
    %v1983 = vpop.f32.mrb[0].mxu0
    %1984 = vmatprep.mubr.bf16.mxu0 %v1634
    %1985 = vmatmul.mubr.bf16.gmra.mrb[0].mxu0 %v1633
    %v1986 = vpop.f32.mrb[0].mxu0
    %v1987 = vadd.f32 %v1826, %v1986
    %v1988 = vpop.f32.mrb[0].mxu0
    %v1989 = vpop.f32.mrb[0].mxu0
    %v1990 = vadd.f32 %v1829, %v1989
    %v1991 = vpop.f32.mrb[0].mxu0
    %1992 = vmatprep.mubr.bf16.mxu0 %v1638
    %1993 = vmatmul.mubr.bf16.gmra.mrb[0].mxu0 %v1637
    %v1994 = vpop.f32.mrb[0].mxu0
    %v1995 = vadd.f32 %v1834, %v1994
    %v1996 = vpop.f32.mrb[0].mxu0
    %v1997 = vpop.f32.mrb[0].mxu0
    %v1998 = vadd.f32 %v1837, %v1997
    %v1999 = vpop.f32.mrb[0].mxu0
    %2000 = vmatprep.mubr.bf16.mxu0 %v1642
    %2001 = vmatmul.mubr.bf16.gmra.mrb[0].mxu0 %v1641
    %v2002 = vpop.f32.mrb[0].mxu0
    %v2003 = vadd.f32 %v1842, %v2002
    %v2004 = vpop.f32.mrb[0].mxu0
    %v2005 = vpop.f32.mrb[0].mxu0
    %v2006 = vadd.f32 %v1845, %v2005
    %v2007 = vpop.f32.mrb[0].mxu0
    %2008 = vmatprep.mubr.bf16.mxu0 %v1646
    %2009 = vmatmul.mubr.bf16.gmra.mrb[0].mxu0 %v1645
    %v2010 = vpop.f32.mrb[0].mxu0
    %v2011 = vadd.f32 %v1850, %v2010
    %v2012 = vpop.f32.mrb[0].mxu0
    %v2013 = vpop.f32.mrb[0].mxu0
    %v2014 = vadd.f32 %v1853, %v2013
    %v2015 = vpop.f32.mrb[0].mxu0
    %2016 = vmatprep.mubr.bf16.mxu0 %v1650
    %2017 = vmatmul.mubr.bf16.gmra.mrb[0].mxu0 %v1649
    %v2018 = vpop.f32.mrb[0].mxu0
    %v2019 = vadd.f32 %v1858, %v2018
    %v2020 = vpop.f32.mrb[0].mxu0
    %v2021 = vpop.f32.mrb[0].mxu0
    %v2022 = vadd.f32 %v1861, %v2021
    %v2023 = vpop.f32.mrb[0].mxu0
    %2024 = vmatprep.mubr.bf16.mxu0 %v1654
    %2025 = vmatmul.mubr.bf16.gmra.mrb[0].mxu0 %v1653
    %v2026 = vpop.f32.mrb[0].mxu0
    %v2027 = vadd.f32 %v1866, %v2026
    %v2028 = vpop.f32.mrb[0].mxu0
    %v2029 = vpop.f32.mrb[0].mxu0
    %v2030 = vadd.f32 %v1869, %v2029
    %v2031 = vpop.f32.mrb[0].mxu0
    %2032 = vmatprep.mubr.bf16.mxu0 %v1658
    %2033 = vmatmul.mubr.bf16.gmra.mrb[0].mxu0 %v1657
    %v2034 = vpop.f32.mrb[0].mxu0
    %v2035 = vadd.f32 %v1874, %v2034
    %v2036 = vpop.f32.mrb[0].mxu0
    %v2037 = vpop.f32.mrb[0].mxu0
    %v2038 = vadd.f32 %v1877, %v2037
    %v2039 = vpop.f32.mrb[0].mxu0
    %2040 = vmatprep.mubr.bf16.mxu0 %v1662
    %2041 = vmatmul.mubr.bf16.gmra.mrb[0].mxu0 %v1661
    %v2042 = vpop.f32.mrb[0].mxu0
    %v2043 = vadd.f32 %v1882, %v2042
    %v2044 = vpop.f32.mrb[0].mxu0
    %v2045 = vpop.f32.mrb[0].mxu0
    %v2046 = vadd.f32 %v1885, %v2045
    %v2047 = vpop.f32.mrb[0].mxu0
    %2048 = vdwg.mxu0
    %v2049 = vmax.f32 %v1923, 0.0
    %v2050 = vmax.f32 %v1926, 0.0
    %v2051 = vmax.f32 %v1931, 0.0
    %v2052 = vmax.f32 %v1934, 0.0
    %v2053 = vmax.f32 %v1939, 0.0
    %v2054 = vmax.f32 %v1942, 0.0
    %v2055 = vmax.f32 %v1947, 0.0
    %v2056 = vmax.f32 %v1950, 0.0
    %v2057 = vmax.f32 %v1955, 0.0
    %v2058 = vmax.f32 %v1958, 0.0
    %v2059 = vmax.f32 %v1963, 0.0
    %v2060 = vmax.f32 %v1966, 0.0
    %v2061 = vmax.f32 %v1971, 0.0
    %v2062 = vmax.f32 %v1974, 0.0
    %v2063 = vmax.f32 %v1979, 0.0
    %v2064 = vmax.f32 %v1982, 0.0
    %v2065 = vmax.f32 %v1987, 0.0
    %v2066 = vmax.f32 %v1990, 0.0
    %v2067 = vmax.f32 %v1995, 0.0
    %v2068 = vmax.f32 %v1998, 0.0
    %v2069 = vmax.f32 %v2003, 0.0
    %v2070 = vmax.f32 %v2006, 0.0
    %v2071 = vmax.f32 %v2011, 0.0
    %v2072 = vmax.f32 %v2014, 0.0
    %v2073 = vmax.f32 %v2019, 0.0
    %v2074 = vmax.f32 %v2022, 0.0
    %v2075 = vmax.f32 %v2027, 0.0
    %v2076 = vmax.f32 %v2030, 0.0
    %v2077 = vmax.f32 %v2035, 0.0
    %v2078 = vmax.f32 %v2038, 0.0
    %v2079 = vmax.f32 %v2043, 0.0
    %v2080 = vmax.f32 %v2046, 0.0
    %v2081 = vld [vmem:[%s5] sm:$0xff]
    %v2082 = vld [vmem:[%s5 + $0x8] sm:$0xff]
    %v2083 = vld [vmem:[%s5 + $0x10] sm:$0xff]
    %v2084 = vld [vmem:[%s5 + $0x18] sm:$0xff]
    %v2085 = vld [vmem:[%s5 + $0x20] sm:$0xff]
    %v2086 = vld [vmem:[%s5 + $0x28] sm:$0xff]
    %v2087 = vld [vmem:[%s5 + $0x30] sm:$0xff]
    %v2088 = vld [vmem:[%s5 + $0x38] sm:$0xff]
    %v2089 = vld [vmem:[%s5 + $0x40] sm:$0xff]
    %v2090 = vld [vmem:[%s5 + $0x48] sm:$0xff]
    %v2091 = vld [vmem:[%s5 + $0x50] sm:$0xff]
    %v2092 = vld [vmem:[%s5 + $0x58] sm:$0xff]
    %v2093 = vld [vmem:[%s5 + $0x60] sm:$0xff]
    %v2094 = vld [vmem:[%s5 + $0x68] sm:$0xff]
    %v2095 = vld [vmem:[%s5 + $0x70] sm:$0xff]
    %v2096 = vld [vmem:[%s5 + $0x78] sm:$0xff]
    %v2097 = vld [vmem:[%s5 + $0x80] sm:$0xff]
    %v2098 = vld [vmem:[%s5 + $0x88] sm:$0xff]
    %v2099 = vld [vmem:[%s5 + $0x90] sm:$0xff]
    %v2100 = vld [vmem:[%s5 + $0x98] sm:$0xff]
    %v2101 = vld [vmem:[%s5 + $0xa0] sm:$0xff]
    %v2102 = vld [vmem:[%s5 + $0xa8] sm:$0xff]
    %v2103 = vld [vmem:[%s5 + $0xb0] sm:$0xff]
    %v2104 = vld [vmem:[%s5 + $0xb8] sm:$0xff]
    %v2105 = vld [vmem:[%s5 + $0xc0] sm:$0xff]
    %v2106 = vld [vmem:[%s5 + $0xc8] sm:$0xff]
    %v2107 = vld [vmem:[%s5 + $0xd0] sm:$0xff]
    %v2108 = vld [vmem:[%s5 + $0xd8] sm:$0xff]
    %v2109 = vld [vmem:[%s5 + $0xe0] sm:$0xff]
    %v2110 = vld [vmem:[%s5 + $0xe8] sm:$0xff]
    %v2111 = vld [vmem:[%s5 + $0xf0] sm:$0xff]
    %v2112 = vld [vmem:[%s5 + $0xf8] sm:$0xff]
    %2114 = vset.pattern.permute.xlu0 0
    %2115 = vperm.xlu0 %2114, %v2081
    %v2116 = vpop.permute.xlu0 %2115
    %2119 = vset.pattern.permute.xlu0 0
    %2120 = vperm.xlu0 %2119, %v2082
    %v2121 = vpop.permute.xlu0 %2120
    %2124 = vset.pattern.permute.xlu0 0
    %2125 = vperm.xlu0 %2124, %v2083
    %v2126 = vpop.permute.xlu0 %2125
    %2129 = vset.pattern.permute.xlu0 0
    %2130 = vperm.xlu0 %2129, %v2084
    %v2131 = vpop.permute.xlu0 %2130
    %2134 = vset.pattern.permute.xlu0 0
    %2135 = vperm.xlu0 %2134, %v2085
    %v2136 = vpop.permute.xlu0 %2135
    %2139 = vset.pattern.permute.xlu0 0
    %2140 = vperm.xlu0 %2139, %v2086
    %v2141 = vpop.permute.xlu0 %2140
    %2144 = vset.pattern.permute.xlu0 0
    %2145 = vperm.xlu0 %2144, %v2087
    %v2146 = vpop.permute.xlu0 %2145
    %2149 = vset.pattern.permute.xlu0 0
    %2150 = vperm.xlu0 %2149, %v2088
    %v2151 = vpop.permute.xlu0 %2150
    %2154 = vset.pattern.permute.xlu0 0
    %2155 = vperm.xlu0 %2154, %v2089
    %v2156 = vpop.permute.xlu0 %2155
    %2159 = vset.pattern.permute.xlu0 0
    %2160 = vperm.xlu0 %2159, %v2090
    %v2161 = vpop.permute.xlu0 %2160
    %2164 = vset.pattern.permute.xlu0 0
    %2165 = vperm.xlu0 %2164, %v2091
    %v2166 = vpop.permute.xlu0 %2165
    %2169 = vset.pattern.permute.xlu0 0
    %2170 = vperm.xlu0 %2169, %v2092
    %v2171 = vpop.permute.xlu0 %2170
    %2174 = vset.pattern.permute.xlu0 0
    %2175 = vperm.xlu0 %2174, %v2093
    %v2176 = vpop.permute.xlu0 %2175
    %2179 = vset.pattern.permute.xlu0 0
    %2180 = vperm.xlu0 %2179, %v2094
    %v2181 = vpop.permute.xlu0 %2180
    %2184 = vset.pattern.permute.xlu0 0
    %2185 = vperm.xlu0 %2184, %v2095
    %v2186 = vpop.permute.xlu0 %2185
    %2189 = vset.pattern.permute.xlu0 0
    %2190 = vperm.xlu0 %2189, %v2096
    %v2191 = vpop.permute.xlu0 %2190
    %2194 = vset.pattern.permute.xlu0 0
    %2195 = vperm.xlu0 %2194, %v2097
    %v2196 = vpop.permute.xlu0 %2195
    %2199 = vset.pattern.permute.xlu0 0
    %2200 = vperm.xlu0 %2199, %v2098
    %v2201 = vpop.permute.xlu0 %2200
    %2204 = vset.pattern.permute.xlu0 0
    %2205 = vperm.xlu0 %2204, %v2099
    %v2206 = vpop.permute.xlu0 %2205
    %2209 = vset.pattern.permute.xlu0 0
    %2210 = vperm.xlu0 %2209, %v2100
    %v2211 = vpop.permute.xlu0 %2210
    %2214 = vset.pattern.permute.xlu0 0
    %2215 = vperm.xlu0 %2214, %v2101
    %v2216 = vpop.permute.xlu0 %2215
    %2219 = vset.pattern.permute.xlu0 0
    %2220 = vperm.xlu0 %2219, %v2102
    %v2221 = vpop.permute.xlu0 %2220
    %2224 = vset.pattern.permute.xlu0 0
    %2225 = vperm.xlu0 %2224, %v2103
    %v2226 = vpop.permute.xlu0 %2225
    %2229 = vset.pattern.permute.xlu0 0
    %2230 = vperm.xlu0 %2229, %v2104
    %v2231 = vpop.permute.xlu0 %2230
    %2234 = vset.pattern.permute.xlu0 0
    %2235 = vperm.xlu0 %2234, %v2105
    %v2236 = vpop.permute.xlu0 %2235
    %2239 = vset.pattern.permute.xlu0 0
    %2240 = vperm.xlu0 %2239, %v2106
    %v2241 = vpop.permute.xlu0 %2240
    %2244 = vset.pattern.permute.xlu0 0
    %2245 = vperm.xlu0 %2244, %v2107
    %v2246 = vpop.permute.xlu0 %2245
    %2249 = vset.pattern.permute.xlu0 0
    %2250 = vperm.xlu0 %2249, %v2108
    %v2251 = vpop.permute.xlu0 %2250
    %2254 = vset.pattern.permute.xlu0 0
    %2255 = vperm.xlu0 %2254, %v2109
    %v2256 = vpop.permute.xlu0 %2255
    %2259 = vset.pattern.permute.xlu0 0
    %2260 = vperm.xlu0 %2259, %v2110
    %v2261 = vpop.permute.xlu0 %2260
    %2264 = vset.pattern.permute.xlu0 0
    %2265 = vperm.xlu0 %2264, %v2111
    %v2266 = vpop.permute.xlu0 %2265
    %2269 = vset.pattern.permute.xlu0 0
    %2270 = vperm.xlu0 %2269, %v2112
    %v2271 = vpop.permute.xlu0 %2270
    %v2273 = vmul.f32 %v2049, %v2116
    %v2274 = vmul.f32 %v2050, %v2121
    %v2275 = vmul.f32 %v2051, %v2126
    %v2276 = vmul.f32 %v2052, %v2131
    %v2277 = vmul.f32 %v2053, %v2136
    %v2278 = vmul.f32 %v2054, %v2141
    %v2279 = vmul.f32 %v2055, %v2146
    %v2280 = vmul.f32 %v2056, %v2151
    %v2281 = vmul.f32 %v2057, %v2156
    %v2282 = vmul.f32 %v2058, %v2161
    %v2283 = vmul.f32 %v2059, %v2166
    %v2284 = vmul.f32 %v2060, %v2171
    %v2285 = vmul.f32 %v2061, %v2176
    %v2286 = vmul.f32 %v2062, %v2181
    %v2287 = vmul.f32 %v2063, %v2186
    %v2288 = vmul.f32 %v2064, %v2191
    %v2289 = vmul.f32 %v2065, %v2196
    %v2290 = vmul.f32 %v2066, %v2201
    %v2291 = vmul.f32 %v2067, %v2206
    %v2292 = vmul.f32 %v2068, %v2211
    %v2293 = vmul.f32 %v2069, %v2216
    %v2294 = vmul.f32 %v2070, %v2221
    %v2295 = vmul.f32 %v2071, %v2226
    %v2296 = vmul.f32 %v2072, %v2231
    %v2297 = vmul.f32 %v2073, %v2236
    %v2298 = vmul.f32 %v2074, %v2241
    %v2299 = vmul.f32 %v2075, %v2246
    %v2300 = vmul.f32 %v2076, %v2251
    %v2301 = vmul.f32 %v2077, %v2256
    %v2302 = vmul.f32 %v2078, %v2261
    %v2303 = vmul.f32 %v2079, %v2266
    %v2304 = vmul.f32 %v2080, %v2271
    %v2305 = vadd.f32 %v2273, %v2274
    %v2306 = vadd.f32 %v2305, %v2275
    %v2307 = vadd.f32 %v2306, %v2276
    %v2308 = vadd.f32 %v2307, %v2277
    %v2309 = vadd.f32 %v2308, %v2278
    %v2310 = vadd.f32 %v2309, %v2279
    %v2311 = vadd.f32 %v2310, %v2280
    %v2312 = vadd.f32 %v2311, %v2281
    %v2313 = vadd.f32 %v2312, %v2282
    %v2314 = vadd.f32 %v2313, %v2283
    %v2315 = vadd.f32 %v2314, %v2284
    %v2316 = vadd.f32 %v2315, %v2285
    %v2317 = vadd.f32 %v2316, %v2286
    %v2318 = vadd.f32 %v2317, %v2287
    %v2319 = vadd.f32 %v2318, %v2288
    %v2320 = vadd.f32 %v2319, %v2289
    %v2321 = vadd.f32 %v2320, %v2290
    %v2322 = vadd.f32 %v2321, %v2291
    %v2323 = vadd.f32 %v2322, %v2292
    %v2324 = vadd.f32 %v2323, %v2293
    %v2325 = vadd.f32 %v2324, %v2294
    %v2326 = vadd.f32 %v2325, %v2295
    %v2327 = vadd.f32 %v2326, %v2296
    %v2328 = vadd.f32 %v2327, %v2297
    %v2329 = vadd.f32 %v2328, %v2298
    %v2330 = vadd.f32 %v2329, %v2299
    %v2331 = vadd.f32 %v2330, %v2300
    %v2332 = vadd.f32 %v2331, %v2301
    %v2333 = vadd.f32 %v2332, %v2302
    %v2334 = vadd.f32 %v2333, %v2303
    %v2335 = vadd.f32 %v2334, %v2304
    %v2336 = vrot.slane %v2335, 4
    %v2337 = vadd.f32 %v2335, %v2336
    %v2338 = vrot.slane %v2337, 2
    %v2339 = vadd.f32 %v2337, %v2338
    %v2340 = vrot.slane %v2339, 1
    %v2341 = vadd.f32 %v2339, %v2340
    %s2342 = sld [smem:[#allocation2]]
    %v2343 = vstv %s2342
    %v2344 = vadd.f32 %v2341, %v2343
    %2345 = vst [vmem:[#allocation3] sm:$0x1] %v2344
    // Predicated region
    $region30: #{tpu_custom_call.1} parent=1 // pred_check
      _
    $region31: #{tpu_custom_call.1} parent=1 // pred_check_branch
      %2347 = sbr.rel (0) target = $region33
    $region32: #{tpu_custom_call.1} parent=1 // pred_region
      %s2349 = ssub.s32 16, 16
      %2350 = vsyncadd [#allocation4], %s2349
      %s2352 = sshll.u32 [#allocation3], 4
      %s2353 = int_to_ptr.vmem [resolvable:$true] %s2352
      %2355 = dma.vmem_to_hbm [thread:$0]  %s2353, 16, %s7, [#allocation4]
    $region33: #{tpu_custom_call.1} parent=1 // pred_fallthru
      _
    // Predicated region
    $region34: #{tpu_custom_call.1} parent=1 // pred_check
      _
    $region35: #{tpu_custom_call.1} parent=1 // pred_check_branch
      %2357 = sbr.rel (0) target = $region37
    $region36: #{tpu_custom_call.1} parent=1 // pred_region
      %2358 = dma.done [#allocation4], 16
    $region37: #{tpu_custom_call.1} parent=1 // pred_fallthru
      _
    %2359 = vsyncpa [#allocation4], 1

</llo_original>
